<compile_context>
chip_gen: v7x
topology: tpu7x:2x2x1
jax: 0.10.0
libtpu: 0.0.40
codegen_flags: <defaults>
</compile_context>

<pallas_src>
import math

import jax
import jax.numpy as jnp
from jax.experimental import pallas as pl
from jax.experimental.pallas import tpu as pltpu

# ---- synthetic small "t5-base-like" config (demb == d_model) ----
DEMB = 32          # args.demb / d_model
N_HEADS = 4
D_KV = 8           # per-head dim (N_HEADS * D_KV == DEMB)
INNER = N_HEADS * D_KV
D_FF = 64
VOCAB = 128
N_LAYERS = 2
NUM_BUCKETS = 32
MAX_DISTANCE = 128
LN_EPS = 1e-6
NEG_BIAS = -1e9    # large-but-safe mask value (avoids -inf overflow concerns)

# packed per-layer weight slab layout
W_IN_COLS = 6 * INNER + D_FF     # [sa_q|sa_k|sa_v|ca_q|ca_k|ca_v|wi] -> 256 (lane-dense 2x128)
W_OUT_ROWS = 2 * INNER + D_FF    # [sa_o|ca_o|wo] rows                -> 128

BF16 = jnp.bfloat16
F32 = jnp.float32


# ------------------------- fused decoder Pallas kernel ----------------------

def _rms(x, w):                                   # T5 RMSNorm (f32 math)
    var = jnp.mean(x * x, axis=-1, keepdims=True)
    return x * jax.lax.rsqrt(var + LN_EPS) * w


def _mm(a, b):                                    # a @ b, f32 accumulation
    return jnp.dot(a, b, preferred_element_type=F32)


def _mm_nt(a, b):                                 # a @ b.T (no transpose materialized)
    return jax.lax.dot_general(a, b, (((1,), (1,)), ((), ())),
                               preferred_element_type=F32)


def _softmax_rows(s):
    m = jnp.max(s, axis=-1, keepdims=True)
    e = jnp.exp(s - m)
    return e * pl.reciprocal(jnp.sum(e, axis=-1, keepdims=True), approx=True)


def _mha(q_bf, k_bf, v_bf, bias, o_w):
    """Multi-head attention for one batch element with fused softmax.

    q_bf: (L_q, INNER) bf16; k_bf/v_bf: (L_k, INNER) bf16;
    bias broadcastable to (H*L_q, L_k) f32; o_w: (INNER, DEMB) bf16.
    Head scores are stacked along sublanes -> single softmax; each head's
    context is projected directly into the residual (no scratch writes).
    """
    L_q = q_bf.shape[0]
    s = jnp.concatenate(
        [_mm_nt(q_bf[:, h * D_KV:(h + 1) * D_KV],
                k_bf[:, h * D_KV:(h + 1) * D_KV]) for h in range(N_HEADS)],
        axis=0) + bias                                     # (H*L_q, L_k) f32
    p_bf = _softmax_rows(s).astype(BF16)
    out = jnp.zeros((L_q, DEMB), F32)
    for h in range(N_HEADS):
        ctx = _mm(p_bf[h * L_q:(h + 1) * L_q, :],
                  v_bf[:, h * D_KV:(h + 1) * D_KV])        # (L_q, D_KV) f32
        out = out + _mm(ctx.astype(BF16), o_w[h * D_KV:(h + 1) * D_KV, :])
    return out


def _decoder_kernel(dec_emb_ref, enc_emb_ref, self_bias_ref, cross_bias_ref,
                    labels_ref, w_in_ref, w_out_ref, ln_ref, lm_head_ref,
                    logits_ref, loss_ref):
    """One grid step = one batch element: N-layer T5 decoder + LM head + CE parts."""
    hidden0 = dec_emb_ref[...].astype(F32)                 # (L_dec, D)
    enc_bf = enc_emb_ref[...]                              # (L_enc, D) bf16
    self_bias = self_bias_ref[...]                         # (H*L_dec, L_dec) f32
    cross_bias = cross_bias_ref[...]                       # (1, L_enc) f32

    def layer(l, hidden):
        w_in = w_in_ref[l]                                 # (D, 256) bf16
        w_out = w_out_ref[l]                               # (128, D) bf16
        ln = ln_ref[l]                                     # (8, D) f32

        # ---- self-attention (fused QKV projection) ----
        x = _rms(hidden, ln[0:1, :]).astype(BF16)
        qkv = _mm(x, w_in[:, 0:3 * INNER]).astype(BF16)    # (L_dec, 3*INNER)
        hidden = hidden + _mha(qkv[:, 0:INNER],
                               qkv[:, INNER:2 * INNER],
                               qkv[:, 2 * INNER:3 * INNER],
                               self_bias,
                               w_out[0:INNER, :])

        # ---- cross-attention (fused K/V projection on encoder memory) ----
        x = _rms(hidden, ln[1:2, :]).astype(BF16)
        q = _mm(x, w_in[:, 3 * INNER:4 * INNER]).astype(BF16)
        kv = _mm(enc_bf, w_in[:, 4 * INNER:6 * INNER]).astype(BF16)
        hidden = hidden + _mha(q, kv[:, 0:INNER], kv[:, INNER:2 * INNER],
                               cross_bias,
                               w_out[INNER:2 * INNER, :])

        # ---- feed-forward (ReLU DenseReluDense) ----
        x = _rms(hidden, ln[2:3, :]).astype(BF16)
        h1 = jnp.maximum(_mm(x, w_in[:, 6 * INNER:6 * INNER + D_FF]), 0.0)
        hidden = hidden + _mm(h1.astype(BF16),
                              w_out[2 * INNER:2 * INNER + D_FF, :])
        return hidden

    hidden = jax.lax.fori_loop(0, N_LAYERS, layer, hidden0)

    # ---- final LN + tied-embedding LM head (lane-dense 128-wide store) ----
    fln = ln_ref[N_LAYERS][0:1, :]
    x = (_rms(hidden, fln) * (DEMB ** -0.5)).astype(BF16)
    logits = _mm(x, lm_head_ref[...])                      # (L_dec, VOCAB) f32
    logits_ref[...] = logits

    # ---- masked cross-entropy partial sums (ignore_index=-100) ----
    labels = labels_ref[...]                               # (L_dec, 1) int32
    m = jnp.max(logits, axis=-1, keepdims=True)
    e = jnp.exp(logits - m)
    lse = jnp.log(jnp.sum(e, axis=-1, keepdims=True)) + m
    cols = jax.lax.broadcasted_iota(jnp.int32, logits.shape, 1)
    tgt = jnp.sum(jnp.where(cols == labels, logits, 0.0), axis=-1, keepdims=True)
    valid = (labels != -100).astype(F32)
    per_tok = (lse - tgt) * valid
    loss_ref[...] = jnp.concatenate(
        [jnp.sum(per_tok, axis=0, keepdims=True),
         jnp.sum(valid, axis=0, keepdims=True)], axis=1)   # (1, 2): [sum, count]


# ------------------------------- JAX glue ----------------------------------

def _shift_right(labels):
    # T5._shift_right: decoder_start_token_id = 0, pad_token_id = 0
    shifted = jnp.zeros_like(labels)
    shifted = shifted.at[:, 1:].set(labels[:, :-1])
    shifted = shifted.at[:, 0].set(0)
    return jnp.where(shifted == -100, 0, shifted)


def _relative_position_bucket(relative_position):
    # T5 decoder self-attention: bidirectional=False
    rp = -jnp.minimum(relative_position, 0)
    max_exact = NUM_BUCKETS // 2
    is_small = rp < max_exact
    rp_large = max_exact + (
        jnp.log(jnp.maximum(rp, 1).astype(F32) / max_exact)
        / math.log(MAX_DISTANCE / max_exact) * (NUM_BUCKETS - max_exact)
    ).astype(jnp.int32)
    rp_large = jnp.minimum(rp_large, NUM_BUCKETS - 1)
    return jnp.where(is_small, rp, rp_large)


def _position_bias(rel_bias_w, Lq, Lk):
    ctx = jnp.arange(Lq)[:, None]
    mem = jnp.arange(Lk)[None, :]
    buckets = _relative_position_bucket(mem - ctx)        # (Lq, Lk)
    values = rel_bias_w[buckets]                          # (Lq, Lk, H)
    return jnp.transpose(values, (2, 0, 1))               # (H, Lq, Lk)


def init_params(key):
    def nrm(k, shape, scale=0.05):
        return scale * jax.random.normal(k, shape, F32)

    keys = jax.random.split(key, 2 + N_LAYERS)
    params = {
        'shared': nrm(keys[0], (VOCAB, DEMB), 1.0),       # tied embedding / lm_head
        'rel_bias': nrm(keys[1], (NUM_BUCKETS, N_HEADS), 0.5),
        'final_ln': jnp.ones((DEMB,), F32),
        'layers': [],
    }
    for i in range(N_LAYERS):
        lk = jax.random.split(keys[2 + i], 10)
        params['layers'].append({
            'sa_ln': jnp.ones((DEMB,), F32),
            'sa_q': nrm(lk[0], (INNER, DEMB)),
            'sa_k': nrm(lk[1], (INNER, DEMB)),
            'sa_v': nrm(lk[2], (INNER, DEMB)),
            'sa_o': nrm(lk[3], (DEMB, INNER)),
            'ca_ln': jnp.ones((DEMB,), F32),
            'ca_q': nrm(lk[4], (INNER, DEMB)),
            'ca_k': nrm(lk[5], (INNER, DEMB)),
            'ca_v': nrm(lk[6], (INNER, DEMB)),
            'ca_o': nrm(lk[7], (DEMB, INNER)),
            'ff_ln': jnp.ones((DEMB,), F32),
            'wi': nrm(lk[8], (D_FF, DEMB)),
            'wo': nrm(lk[9], (DEMB, D_FF)),
        })
    return params


def prepare_params(params):
    """One-time weight prep: transpose to (in, out), fuse Q/K/V (and cross K/V)
    projections, pack per-layer weights into lane-dense bf16 slabs, fold all
    LayerNorm weights into one f32 slab -> 9 kernel operands instead of 17."""
    layers = params['layers']

    w_in = jnp.stack([
        jnp.concatenate([l['sa_q'].T, l['sa_k'].T, l['sa_v'].T,
                         l['ca_q'].T, l['ca_k'].T, l['ca_v'].T,
                         l['wi'].T], axis=1)
        for l in layers]).astype(BF16)                    # (N_LAYERS, D, 256)

    w_out = jnp.stack([
        jnp.concatenate([l['sa_o'].T, l['ca_o'].T, l['wo'].T], axis=0)
        for l in layers]).astype(BF16)                    # (N_LAYERS, 128, D)

    ln = jnp.zeros((N_LAYERS + 1, 8, DEMB), F32)          # padded to 8 sublanes
    for i, l in enumerate(layers):
        ln = ln.at[i, 0].set(l['sa_ln'])
        ln = ln.at[i, 1].set(l['ca_ln'])
        ln = ln.at[i, 2].set(l['ff_ln'])
    ln = ln.at[N_LAYERS, 0].set(params['final_ln'])

    shared_bf = params['shared'].astype(BF16)
    return {
        'shared': shared_bf,                              # embedding gather (JAX glue)
        'rel_bias': params['rel_bias'],
        'w_in': w_in,
        'w_out': w_out,
        'ln': ln,
        'lm_head': shared_bf.T,                           # (D, VOCAB) bf16, tied
    }


def encoder_vl_forward(prep, input_emb, input_mask, gt_action):
    """EncoderVL.forward: T5 decoder over given encoder_outputs, returns
    {'action': logits, 'loss': loss}. One fused Pallas kernel, grid over batch."""
    B, L_enc, _ = input_emb.shape
    L_dec = gt_action.shape[1]

    # integer glue (stays in JAX): shift-right + embedding gather
    dec_ids = _shift_right(gt_action)
    dec_emb = prep['shared'][dec_ids]                     # (B, L_dec, D) bf16

    # self-attention bias: causal mask + rel-pos bias, un-broadcast (H*L, L)
    causal = jnp.tril(jnp.ones((L_dec, L_dec), F32))
    self_mask = (1.0 - causal) * NEG_BIAS
    pos_bias = _position_bias(prep['rel_bias'], L_dec, L_dec)     # (H, L, L)
    self_bias = (pos_bias + self_mask[None]).reshape(N_HEADS * L_dec, L_dec)

    # cross-attention bias: encoder padding mask, per batch (B, 1, L_enc)
    cross_bias = ((1.0 - input_mask.astype(F32)) * NEG_BIAS).reshape(B, 1, L_enc)

    labels = gt_action.astype(jnp.int32).reshape(B, L_dec, 1)

    # TODO(synk): dropout omitted (deterministic forward).
    # TODO(synk): at production sizes (D=768, L~512, real vocab) add grid axes
    # over sequence/vocab with streaming LSE for the LM-head/CE epilogue and
    # re-budget block sizes for v7x's 64 MiB VMEM (~half of v5e/v6e).
    grid_spec = pltpu.PrefetchScalarGridSpec(
        num_scalar_prefetch=0,
        grid=(B,),
        in_specs=[
            pl.BlockSpec((None, L_dec, DEMB), lambda b: (b, 0, 0)),      # dec_emb
            pl.BlockSpec((None, L_enc, DEMB), lambda b: (b, 0, 0)),      # enc_emb
            pl.BlockSpec((N_HEADS * L_dec, L_dec), lambda b: (0, 0)),    # self_bias
            pl.BlockSpec((None, 1, L_enc), lambda b: (b, 0, 0)),         # cross_bias
            pl.BlockSpec((None, L_dec, 1), lambda b: (b, 0, 0)),         # labels
            pl.BlockSpec((N_LAYERS, DEMB, W_IN_COLS), lambda b: (0, 0, 0)),
            pl.BlockSpec((N_LAYERS, W_OUT_ROWS, DEMB), lambda b: (0, 0, 0)),
            pl.BlockSpec((N_LAYERS + 1, 8, DEMB), lambda b: (0, 0, 0)),
            pl.BlockSpec((DEMB, VOCAB), lambda b: (0, 0)),               # lm_head
        ],
        out_specs=(
            pl.BlockSpec((None, L_dec, VOCAB), lambda b: (b, 0, 0)),     # logits
            pl.BlockSpec((None, 1, 2), lambda b: (b, 0, 0)),             # [sum, count]
        ),
    )

    logits, loss_parts = pl.pallas_call(
        _decoder_kernel,
        grid_spec=grid_spec,
        out_shape=(jax.ShapeDtypeStruct((B, L_dec, VOCAB), F32),
                   jax.ShapeDtypeStruct((B, 1, 2), F32)),
        compiler_params=pltpu.CompilerParams(
            dimension_semantics=("parallel",)),
    )(dec_emb, input_emb.astype(BF16), self_bias, cross_bias, labels,
      prep['w_in'], prep['w_out'], prep['ln'], prep['lm_head'])

    total = jnp.sum(loss_parts[:, 0, 0])
    count = jnp.sum(loss_parts[:, 0, 1])
    # TODO(synk): PyTorch CE returns NaN when every label is -100; we return 0.
    loss = total / jnp.maximum(count, 1.0)
    return {'action': logits, 'loss': loss}


if __name__ == "__main__":
    B, L_ENC, L_DEC = 2, 8, 8

    key = jax.random.PRNGKey(0)
    k_params, k_emb, k_lbl = jax.random.split(key, 3)

    params = init_params(k_params)
    prep = prepare_params(params)                         # one-time weight prep

    input_emb = jax.random.normal(k_emb, (B, L_ENC, DEMB), F32)
    input_mask = jnp.array(
        [[1.0] * L_ENC,
         [1.0] * (L_ENC - 2) + [0.0] * 2], dtype=F32)
    gt_action = jax.random.randint(k_lbl, (B, L_DEC), 0, VOCAB, dtype=jnp.int32)
    gt_action = gt_action.at[1, -2:].set(-100)            # ignored label positions

    fwd = jax.jit(encoder_vl_forward)
    out = fwd(prep, input_emb, input_mask, gt_action)
    out = jax.block_until_ready(out)

    assert out['action'].shape == (B, L_DEC, VOCAB)
    assert out['action'].dtype == jnp.float32
    assert out['loss'].shape == ()
    assert bool(jnp.isfinite(out['loss']))
    print("KERNEL_OK")
</pallas_src>

<mosaic_0001>
module attributes {stable_mosaic.version = 11 : i64} {
  func.func @_decoder_kernel(%arg0: i32, %arg1: memref<1x8x32xbf16, #tpu.memory_space<vmem>>, %arg2: memref<1x8x32xbf16, #tpu.memory_space<vmem>>, %arg3: memref<32x8xf32, #tpu.memory_space<vmem>>, %arg4: memref<1x1x8xf32, #tpu.memory_space<vmem>>, %arg5: memref<1x8x1xi32, #tpu.memory_space<vmem>>, %arg6: memref<2x32x256xbf16, #tpu.memory_space<vmem>>, %arg7: memref<2x128x32xbf16, #tpu.memory_space<vmem>>, %arg8: memref<3x8x32xf32, #tpu.memory_space<vmem>>, %arg9: memref<32x128xbf16, #tpu.memory_space<vmem>>, %arg10: memref<1x8x128xf32, #tpu.memory_space<vmem>>, %arg11: memref<1x1x2xf32, #tpu.memory_space<vmem>>) attributes {dimension_semantics = [#tpu.dimension_semantics<parallel>], iteration_bounds = array<i64: 2>, scalar_prefetch = 0 : i64, scratch_operands = 0 : i64, tpu.core_type = #tpu.core_type<tc>, window_params = [{transform_indices = @transform_0, window_bounds = array<i64: 1, 8, 32>}, {transform_indices = @transform_1, window_bounds = array<i64: 1, 8, 32>}, {pipeline_mode = #tpu.pipeline_mode<synchronous>, transform_indices = @transform_2, window_bounds = array<i64: 32, 8>}, {transform_indices = @transform_3, window_bounds = array<i64: 1, 1, 8>}, {transform_indices = @transform_4, window_bounds = array<i64: 1, 8, 1>}, {pipeline_mode = #tpu.pipeline_mode<synchronous>, transform_indices = @transform_5, window_bounds = array<i64: 2, 32, 256>}, {pipeline_mode = #tpu.pipeline_mode<synchronous>, transform_indices = @transform_6, window_bounds = array<i64: 2, 128, 32>}, {pipeline_mode = #tpu.pipeline_mode<synchronous>, transform_indices = @transform_7, window_bounds = array<i64: 3, 8, 32>}, {pipeline_mode = #tpu.pipeline_mode<synchronous>, transform_indices = @transform_8, window_bounds = array<i64: 32, 128>}, {transform_indices = @transform_9, window_bounds = array<i64: 1, 8, 128>}, {transform_indices = @transform_10, window_bounds = array<i64: 1, 1, 2>}]} {
    %c0 = arith.constant 0 : index
    %c0_0 = arith.constant 0 : index
    %c0_1 = arith.constant 0 : index
    %0 = vector.load %arg1[%c0, %c0_0, %c0_1] : memref<1x8x32xbf16, #tpu.memory_space<vmem>>, vector<1x8x32xbf16>
    %1 = vector.shape_cast %0 : vector<1x8x32xbf16> to vector<8x32xbf16>
    %2 = arith.extf %1 : vector<8x32xbf16> to vector<8x32xf32>
    %c0_2 = arith.constant 0 : index
    %c0_3 = arith.constant 0 : index
    %c0_4 = arith.constant 0 : index
    %3 = vector.load %arg2[%c0_2, %c0_3, %c0_4] : memref<1x8x32xbf16, #tpu.memory_space<vmem>>, vector<1x8x32xbf16>
    %4 = vector.shape_cast %3 : vector<1x8x32xbf16> to vector<8x32xbf16>
    %c0_5 = arith.constant 0 : index
    %c0_6 = arith.constant 0 : index
    %5 = vector.load %arg3[%c0_5, %c0_6] : memref<32x8xf32, #tpu.memory_space<vmem>>, vector<32x8xf32>
    %c0_7 = arith.constant 0 : index
    %c0_8 = arith.constant 0 : index
    %c0_9 = arith.constant 0 : index
    %6 = vector.load %arg4[%c0_7, %c0_8, %c0_9] : memref<1x1x8xf32, #tpu.memory_space<vmem>>, vector<1x1x8xf32>
    %7 = vector.shape_cast %6 : vector<1x1x8xf32> to vector<1x8xf32>
    %c0_i32 = arith.constant 0 : i32
    %c2_i32 = arith.constant 2 : i32
    %8 = arith.addi %c0_i32, %c2_i32 : i32
    %c1_i32 = arith.constant 1 : i32
    %9 = scf.for %arg12 = %c0_i32 to %8 step %c1_i32 iter_args(%arg13 = %2) -> (vector<8x32xf32>)  : i32 {
      %65 = arith.index_cast %arg12 : i32 to index
      %c0_34 = arith.constant 0 : index
      %c0_35 = arith.constant 0 : index
      %66 = vector.load %arg6[%65, %c0_34, %c0_35] : memref<2x32x256xbf16, #tpu.memory_space<vmem>>, vector<1x32x256xbf16>
      %67 = vector.shape_cast %66 : vector<1x32x256xbf16> to vector<32x256xbf16>
      %68 = arith.index_cast %arg12 : i32 to index
      %c0_36 = arith.constant 0 : index
      %c0_37 = arith.constant 0 : index
      %69 = vector.load %arg7[%68, %c0_36, %c0_37] : memref<2x128x32xbf16, #tpu.memory_space<vmem>>, vector<1x128x32xbf16>
      %70 = vector.shape_cast %69 : vector<1x128x32xbf16> to vector<128x32xbf16>
      %71 = arith.index_cast %arg12 : i32 to index
      %c0_38 = arith.constant 0 : index
      %c0_39 = arith.constant 0 : index
      %72 = vector.load %arg8[%71, %c0_38, %c0_39] : memref<3x8x32xf32, #tpu.memory_space<vmem>>, vector<1x8x32xf32>
      %73 = vector.shape_cast %72 : vector<1x8x32xf32> to vector<8x32xf32>
      %74 = vector.extract_strided_slice %73 {offsets = [0, 0], sizes = [1, 32], strides = [1, 1]} : vector<8x32xf32> to vector<1x32xf32>
      %75 = arith.mulf %arg13, %arg13 : vector<8x32xf32>
      %cst_40 = arith.constant dense<0.000000e+00> : vector<8xf32>
      %76 = vector.multi_reduction <add>, %75, %cst_40 [1] : vector<8x32xf32> to vector<8xf32>
      %77 = vector.shape_cast %76 : vector<8xf32> to vector<8x1xf32>
      %cst_41 = arith.constant 3.200000e+01 : f32
      %78 = vector.broadcast %cst_41 : f32 to vector<8x1xf32>
      %79 = arith.divf %77, %78 : vector<8x1xf32>
      %cst_42 = arith.constant 9.99999997E-7 : f32
      %80 = vector.broadcast %cst_42 : f32 to vector<8x1xf32>
      %81 = arith.addf %79, %80 : vector<8x1xf32>
      %82 = math.rsqrt %81 : vector<8x1xf32>
      %83 = vector.broadcast %82 : vector<8x1xf32> to vector<8x32xf32>
      %84 = arith.mulf %arg13, %83 : vector<8x32xf32>
      %85 = vector.broadcast %74 : vector<1x32xf32> to vector<8x32xf32>
      %86 = arith.mulf %84, %85 : vector<8x32xf32>
      %87 = arith.truncf %86 : vector<8x32xf32> to vector<8x32xbf16>
      %88 = vector.extract_strided_slice %67 {offsets = [0, 0], sizes = [32, 96], strides = [1, 1]} : vector<32x256xbf16> to vector<32x96xbf16>
      %cst_43 = arith.constant dense<0.000000e+00> : vector<8x96xf32>
      %89 = tpu.matmul %87, %88, %cst_43 {dimension_numbers = #tpu.dot_dimension_numbers<[1], [0], [0], [1], [0, 0, 1, 1], [], []>} : vector<8x32xbf16>, vector<32x96xbf16>, vector<8x96xf32> -> vector<8x96xf32>
      %90 = arith.truncf %89 : vector<8x96xf32> to vector<8x96xbf16>
      %91 = vector.extract_strided_slice %90 {offsets = [0, 0], sizes = [8, 32], strides = [1, 1]} : vector<8x96xbf16> to vector<8x32xbf16>
      %92 = vector.extract_strided_slice %90 {offsets = [0, 32], sizes = [8, 32], strides = [1, 1]} : vector<8x96xbf16> to vector<8x32xbf16>
      %93 = vector.extract_strided_slice %90 {offsets = [0, 64], sizes = [8, 32], strides = [1, 1]} : vector<8x96xbf16> to vector<8x32xbf16>
      %94 = vector.extract_strided_slice %70 {offsets = [0, 0], sizes = [32, 32], strides = [1, 1]} : vector<128x32xbf16> to vector<32x32xbf16>
      %95 = vector.extract_strided_slice %91 {offsets = [0, 0], sizes = [8, 8], strides = [1, 1]} : vector<8x32xbf16> to vector<8x8xbf16>
      %96 = vector.extract_strided_slice %92 {offsets = [0, 0], sizes = [8, 8], strides = [1, 1]} : vector<8x32xbf16> to vector<8x8xbf16>
      %cst_44 = arith.constant dense<0.000000e+00> : vector<8x8xf32>
      %97 = tpu.matmul %95, %96, %cst_44 {dimension_numbers = #tpu.dot_dimension_numbers<[1], [1], [0], [0], [0, 0, 1, 0], [], []>} : vector<8x8xbf16>, vector<8x8xbf16>, vector<8x8xf32> -> vector<8x8xf32>
      %98 = vector.extract_strided_slice %91 {offsets = [0, 8], sizes = [8, 8], strides = [1, 1]} : vector<8x32xbf16> to vector<8x8xbf16>
      %99 = vector.extract_strided_slice %92 {offsets = [0, 8], sizes = [8, 8], strides = [1, 1]} : vector<8x32xbf16> to vector<8x8xbf16>
      %cst_45 = arith.constant dense<0.000000e+00> : vector<8x8xf32>
      %100 = tpu.matmul %98, %99, %cst_45 {dimension_numbers = #tpu.dot_dimension_numbers<[1], [1], [0], [0], [0, 0, 1, 0], [], []>} : vector<8x8xbf16>, vector<8x8xbf16>, vector<8x8xf32> -> vector<8x8xf32>
      %101 = vector.extract_strided_slice %91 {offsets = [0, 16], sizes = [8, 8], strides = [1, 1]} : vector<8x32xbf16> to vector<8x8xbf16>
      %102 = vector.extract_strided_slice %92 {offsets = [0, 16], sizes = [8, 8], strides = [1, 1]} : vector<8x32xbf16> to vector<8x8xbf16>
      %cst_46 = arith.constant dense<0.000000e+00> : vector<8x8xf32>
      %103 = tpu.matmul %101, %102, %cst_46 {dimension_numbers = #tpu.dot_dimension_numbers<[1], [1], [0], [0], [0, 0, 1, 0], [], []>} : vector<8x8xbf16>, vector<8x8xbf16>, vector<8x8xf32> -> vector<8x8xf32>
      %104 = vector.extract_strided_slice %91 {offsets = [0, 24], sizes = [8, 8], strides = [1, 1]} : vector<8x32xbf16> to vector<8x8xbf16>
      %105 = vector.extract_strided_slice %92 {offsets = [0, 24], sizes = [8, 8], strides = [1, 1]} : vector<8x32xbf16> to vector<8x8xbf16>
      %cst_47 = arith.constant dense<0.000000e+00> : vector<8x8xf32>
      %106 = tpu.matmul %104, %105, %cst_47 {dimension_numbers = #tpu.dot_dimension_numbers<[1], [1], [0], [0], [0, 0, 1, 0], [], []>} : vector<8x8xbf16>, vector<8x8xbf16>, vector<8x8xf32> -> vector<8x8xf32>
      %107 = tpu.concatenate %97, %100, %103, %106 in 0 : vector<8x8xf32>, vector<8x8xf32>, vector<8x8xf32>, vector<8x8xf32> -> vector<32x8xf32>
      %108 = arith.addf %107, %5 : vector<32x8xf32>
      %cst_48 = arith.constant dense<0xFF800000> : vector<32xf32>
      %109 = vector.multi_reduction <maximumf>, %108, %cst_48 [1] : vector<32x8xf32> to vector<32xf32>
      %110 = vector.shape_cast %109 : vector<32xf32> to vector<32x1xf32>
      %111 = vector.broadcast %110 : vector<32x1xf32> to vector<32x8xf32>
      %112 = arith.subf %108, %111 : vector<32x8xf32>
      %113 = math.exp %112 : vector<32x8xf32>
      %cst_49 = arith.constant dense<0.000000e+00> : vector<32xf32>
      %114 = vector.multi_reduction <add>, %113, %cst_49 [1] : vector<32x8xf32> to vector<32xf32>
      %115 = vector.shape_cast %114 : vector<32xf32> to vector<32x1xf32>
      %116 = tpu.reciprocal %115 {approx = true} : vector<32x1xf32> -> vector<32x1xf32>
      %117 = vector.broadcast %116 : vector<32x1xf32> to vector<32x8xf32>
      %118 = arith.mulf %113, %117 : vector<32x8xf32>
      %119 = arith.truncf %118 : vector<32x8xf32> to vector<32x8xbf16>
      %cst_50 = arith.constant 0.000000e+00 : f32
      %120 = vector.broadcast %cst_50 : f32 to vector<8x32xf32>
      %121 = vector.extract_strided_slice %119 {offsets = [0, 0], sizes = [8, 8], strides = [1, 1]} : vector<32x8xbf16> to vector<8x8xbf16>
      %122 = vector.extract_strided_slice %93 {offsets = [0, 0], sizes = [8, 8], strides = [1, 1]} : vector<8x32xbf16> to vector<8x8xbf16>
      %cst_51 = arith.constant dense<0.000000e+00> : vector<8x8xf32>
      %123 = tpu.matmul %121, %122, %cst_51 {dimension_numbers = #tpu.dot_dimension_numbers<[1], [0], [0], [1], [0, 0, 1, 1], [], []>} : vector<8x8xbf16>, vector<8x8xbf16>, vector<8x8xf32> -> vector<8x8xf32>
      %124 = arith.truncf %123 : vector<8x8xf32> to vector<8x8xbf16>
      %125 = vector.extract_strided_slice %94 {offsets = [0, 0], sizes = [8, 32], strides = [1, 1]} : vector<32x32xbf16> to vector<8x32xbf16>
      %cst_52 = arith.constant dense<0.000000e+00> : vector<8x32xf32>
      %126 = tpu.matmul %124, %125, %cst_52 {dimension_numbers = #tpu.dot_dimension_numbers<[1], [0], [0], [1], [0, 0, 1, 1], [], []>} : vector<8x8xbf16>, vector<8x32xbf16>, vector<8x32xf32> -> vector<8x32xf32>
      %127 = arith.addf %120, %126 : vector<8x32xf32>
      %128 = vector.extract_strided_slice %119 {offsets = [8, 0], sizes = [8, 8], strides = [1, 1]} : vector<32x8xbf16> to vector<8x8xbf16>
      %129 = vector.extract_strided_slice %93 {offsets = [0, 8], sizes = [8, 8], strides = [1, 1]} : vector<8x32xbf16> to vector<8x8xbf16>
      %cst_53 = arith.constant dense<0.000000e+00> : vector<8x8xf32>
      %130 = tpu.matmul %128, %129, %cst_53 {dimension_numbers = #tpu.dot_dimension_numbers<[1], [0], [0], [1], [0, 0, 1, 1], [], []>} : vector<8x8xbf16>, vector<8x8xbf16>, vector<8x8xf32> -> vector<8x8xf32>
      %131 = arith.truncf %130 : vector<8x8xf32> to vector<8x8xbf16>
      %132 = vector.extract_strided_slice %94 {offsets = [8, 0], sizes = [8, 32], strides = [1, 1]} : vector<32x32xbf16> to vector<8x32xbf16>
      %cst_54 = arith.constant dense<0.000000e+00> : vector<8x32xf32>
      %133 = tpu.matmul %131, %132, %cst_54 {dimension_numbers = #tpu.dot_dimension_numbers<[1], [0], [0], [1], [0, 0, 1, 1], [], []>} : vector<8x8xbf16>, vector<8x32xbf16>, vector<8x32xf32> -> vector<8x32xf32>
      %134 = arith.addf %127, %133 : vector<8x32xf32>
      %135 = vector.extract_strided_slice %119 {offsets = [16, 0], sizes = [8, 8], strides = [1, 1]} : vector<32x8xbf16> to vector<8x8xbf16>
      %136 = vector.extract_strided_slice %93 {offsets = [0, 16], sizes = [8, 8], strides = [1, 1]} : vector<8x32xbf16> to vector<8x8xbf16>
      %cst_55 = arith.constant dense<0.000000e+00> : vector<8x8xf32>
      %137 = tpu.matmul %135, %136, %cst_55 {dimension_numbers = #tpu.dot_dimension_numbers<[1], [0], [0], [1], [0, 0, 1, 1], [], []>} : vector<8x8xbf16>, vector<8x8xbf16>, vector<8x8xf32> -> vector<8x8xf32>
      %138 = arith.truncf %137 : vector<8x8xf32> to vector<8x8xbf16>
      %139 = vector.extract_strided_slice %94 {offsets = [16, 0], sizes = [8, 32], strides = [1, 1]} : vector<32x32xbf16> to vector<8x32xbf16>
      %cst_56 = arith.constant dense<0.000000e+00> : vector<8x32xf32>
      %140 = tpu.matmul %138, %139, %cst_56 {dimension_numbers = #tpu.dot_dimension_numbers<[1], [0], [0], [1], [0, 0, 1, 1], [], []>} : vector<8x8xbf16>, vector<8x32xbf16>, vector<8x32xf32> -> vector<8x32xf32>
      %141 = arith.addf %134, %140 : vector<8x32xf32>
      %142 = vector.extract_strided_slice %119 {offsets = [24, 0], sizes = [8, 8], strides = [1, 1]} : vector<32x8xbf16> to vector<8x8xbf16>
      %143 = vector.extract_strided_slice %93 {offsets = [0, 24], sizes = [8, 8], strides = [1, 1]} : vector<8x32xbf16> to vector<8x8xbf16>
      %cst_57 = arith.constant dense<0.000000e+00> : vector<8x8xf32>
      %144 = tpu.matmul %142, %143, %cst_57 {dimension_numbers = #tpu.dot_dimension_numbers<[1], [0], [0], [1], [0, 0, 1, 1], [], []>} : vector<8x8xbf16>, vector<8x8xbf16>, vector<8x8xf32> -> vector<8x8xf32>
      %145 = arith.truncf %144 : vector<8x8xf32> to vector<8x8xbf16>
      %146 = vector.extract_strided_slice %94 {offsets = [24, 0], sizes = [8, 32], strides = [1, 1]} : vector<32x32xbf16> to vector<8x32xbf16>
      %cst_58 = arith.constant dense<0.000000e+00> : vector<8x32xf32>
      %147 = tpu.matmul %145, %146, %cst_58 {dimension_numbers = #tpu.dot_dimension_numbers<[1], [0], [0], [1], [0, 0, 1, 1], [], []>} : vector<8x8xbf16>, vector<8x32xbf16>, vector<8x32xf32> -> vector<8x32xf32>
      %148 = arith.addf %141, %147 : vector<8x32xf32>
      %149 = arith.addf %arg13, %148 : vector<8x32xf32>
      %150 = vector.extract_strided_slice %73 {offsets = [1, 0], sizes = [1, 32], strides = [1, 1]} : vector<8x32xf32> to vector<1x32xf32>
      %151 = arith.mulf %149, %149 : vector<8x32xf32>
      %cst_59 = arith.constant dense<0.000000e+00> : vector<8xf32>
      %152 = vector.multi_reduction <add>, %151, %cst_59 [1] : vector<8x32xf32> to vector<8xf32>
      %153 = vector.shape_cast %152 : vector<8xf32> to vector<8x1xf32>
      %cst_60 = arith.constant 3.200000e+01 : f32
      %154 = vector.broadcast %cst_60 : f32 to vector<8x1xf32>
      %155 = arith.divf %153, %154 : vector<8x1xf32>
      %cst_61 = arith.constant 9.99999997E-7 : f32
      %156 = vector.broadcast %cst_61 : f32 to vector<8x1xf32>
      %157 = arith.addf %155, %156 : vector<8x1xf32>
      %158 = math.rsqrt %157 : vector<8x1xf32>
      %159 = vector.broadcast %158 : vector<8x1xf32> to vector<8x32xf32>
      %160 = arith.mulf %149, %159 : vector<8x32xf32>
      %161 = vector.broadcast %150 : vector<1x32xf32> to vector<8x32xf32>
      %162 = arith.mulf %160, %161 : vector<8x32xf32>
      %163 = arith.truncf %162 : vector<8x32xf32> to vector<8x32xbf16>
      %164 = vector.extract_strided_slice %67 {offsets = [0, 96], sizes = [32, 32], strides = [1, 1]} : vector<32x256xbf16> to vector<32x32xbf16>
      %cst_62 = arith.constant dense<0.000000e+00> : vector<8x32xf32>
      %165 = tpu.matmul %163, %164, %cst_62 {dimension_numbers = #tpu.dot_dimension_numbers<[1], [0], [0], [1], [0, 0, 1, 1], [], []>} : vector<8x32xbf16>, vector<32x32xbf16>, vector<8x32xf32> -> vector<8x32xf32>
      %166 = arith.truncf %165 : vector<8x32xf32> to vector<8x32xbf16>
      %167 = vector.extract_strided_slice %67 {offsets = [0, 128], sizes = [32, 64], strides = [1, 1]} : vector<32x256xbf16> to vector<32x64xbf16>
      %cst_63 = arith.constant dense<0.000000e+00> : vector<8x64xf32>
      %168 = tpu.matmul %4, %167, %cst_63 {dimension_numbers = #tpu.dot_dimension_numbers<[1], [0], [0], [1], [0, 0, 1, 1], [], []>} : vector<8x32xbf16>, vector<32x64xbf16>, vector<8x64xf32> -> vector<8x64xf32>
      %169 = arith.truncf %168 : vector<8x64xf32> to vector<8x64xbf16>
      %170 = vector.extract_strided_slice %169 {offsets = [0, 0], sizes = [8, 32], strides = [1, 1]} : vector<8x64xbf16> to vector<8x32xbf16>
      %171 = vector.extract_strided_slice %169 {offsets = [0, 32], sizes = [8, 32], strides = [1, 1]} : vector<8x64xbf16> to vector<8x32xbf16>
      %172 = vector.extract_strided_slice %70 {offsets = [32, 0], sizes = [32, 32], strides = [1, 1]} : vector<128x32xbf16> to vector<32x32xbf16>
      %173 = vector.extract_strided_slice %166 {offsets = [0, 0], sizes = [8, 8], strides = [1, 1]} : vector<8x32xbf16> to vector<8x8xbf16>
      %174 = vector.extract_strided_slice %170 {offsets = [0, 0], sizes = [8, 8], strides = [1, 1]} : vector<8x32xbf16> to vector<8x8xbf16>
      %cst_64 = arith.constant dense<0.000000e+00> : vector<8x8xf32>
      %175 = tpu.matmul %173, %174, %cst_64 {dimension_numbers = #tpu.dot_dimension_numbers<[1], [1], [0], [0], [0, 0, 1, 0], [], []>} : vector<8x8xbf16>, vector<8x8xbf16>, vector<8x8xf32> -> vector<8x8xf32>
      %176 = vector.extract_strided_slice %166 {offsets = [0, 8], sizes = [8, 8], strides = [1, 1]} : vector<8x32xbf16> to vector<8x8xbf16>
      %177 = vector.extract_strided_slice %170 {offsets = [0, 8], sizes = [8, 8], strides = [1, 1]} : vector<8x32xbf16> to vector<8x8xbf16>
      %cst_65 = arith.constant dense<0.000000e+00> : vector<8x8xf32>
      %178 = tpu.matmul %176, %177, %cst_65 {dimension_numbers = #tpu.dot_dimension_numbers<[1], [1], [0], [0], [0, 0, 1, 0], [], []>} : vector<8x8xbf16>, vector<8x8xbf16>, vector<8x8xf32> -> vector<8x8xf32>
      %179 = vector.extract_strided_slice %166 {offsets = [0, 16], sizes = [8, 8], strides = [1, 1]} : vector<8x32xbf16> to vector<8x8xbf16>
      %180 = vector.extract_strided_slice %170 {offsets = [0, 16], sizes = [8, 8], strides = [1, 1]} : vector<8x32xbf16> to vector<8x8xbf16>
      %cst_66 = arith.constant dense<0.000000e+00> : vector<8x8xf32>
      %181 = tpu.matmul %179, %180, %cst_66 {dimension_numbers = #tpu.dot_dimension_numbers<[1], [1], [0], [0], [0, 0, 1, 0], [], []>} : vector<8x8xbf16>, vector<8x8xbf16>, vector<8x8xf32> -> vector<8x8xf32>
      %182 = vector.extract_strided_slice %166 {offsets = [0, 24], sizes = [8, 8], strides = [1, 1]} : vector<8x32xbf16> to vector<8x8xbf16>
      %183 = vector.extract_strided_slice %170 {offsets = [0, 24], sizes = [8, 8], strides = [1, 1]} : vector<8x32xbf16> to vector<8x8xbf16>
      %cst_67 = arith.constant dense<0.000000e+00> : vector<8x8xf32>
      %184 = tpu.matmul %182, %183, %cst_67 {dimension_numbers = #tpu.dot_dimension_numbers<[1], [1], [0], [0], [0, 0, 1, 0], [], []>} : vector<8x8xbf16>, vector<8x8xbf16>, vector<8x8xf32> -> vector<8x8xf32>
      %185 = tpu.concatenate %175, %178, %181, %184 in 0 : vector<8x8xf32>, vector<8x8xf32>, vector<8x8xf32>, vector<8x8xf32> -> vector<32x8xf32>
      %186 = vector.broadcast %7 : vector<1x8xf32> to vector<32x8xf32>
      %187 = arith.addf %185, %186 : vector<32x8xf32>
      %cst_68 = arith.constant dense<0xFF800000> : vector<32xf32>
      %188 = vector.multi_reduction <maximumf>, %187, %cst_68 [1] : vector<32x8xf32> to vector<32xf32>
      %189 = vector.shape_cast %188 : vector<32xf32> to vector<32x1xf32>
      %190 = vector.broadcast %189 : vector<32x1xf32> to vector<32x8xf32>
      %191 = arith.subf %187, %190 : vector<32x8xf32>
      %192 = math.exp %191 : vector<32x8xf32>
      %cst_69 = arith.constant dense<0.000000e+00> : vector<32xf32>
      %193 = vector.multi_reduction <add>, %192, %cst_69 [1] : vector<32x8xf32> to vector<32xf32>
      %194 = vector.shape_cast %193 : vector<32xf32> to vector<32x1xf32>
      %195 = tpu.reciprocal %194 {approx = true} : vector<32x1xf32> -> vector<32x1xf32>
      %196 = vector.broadcast %195 : vector<32x1xf32> to vector<32x8xf32>
      %197 = arith.mulf %192, %196 : vector<32x8xf32>
      %198 = arith.truncf %197 : vector<32x8xf32> to vector<32x8xbf16>
      %cst_70 = arith.constant 0.000000e+00 : f32
      %199 = vector.broadcast %cst_70 : f32 to vector<8x32xf32>
      %200 = vector.extract_strided_slice %198 {offsets = [0, 0], sizes = [8, 8], strides = [1, 1]} : vector<32x8xbf16> to vector<8x8xbf16>
      %201 = vector.extract_strided_slice %171 {offsets = [0, 0], sizes = [8, 8], strides = [1, 1]} : vector<8x32xbf16> to vector<8x8xbf16>
      %cst_71 = arith.constant dense<0.000000e+00> : vector<8x8xf32>
      %202 = tpu.matmul %200, %201, %cst_71 {dimension_numbers = #tpu.dot_dimension_numbers<[1], [0], [0], [1], [0, 0, 1, 1], [], []>} : vector<8x8xbf16>, vector<8x8xbf16>, vector<8x8xf32> -> vector<8x8xf32>
      %203 = arith.truncf %202 : vector<8x8xf32> to vector<8x8xbf16>
      %204 = vector.extract_strided_slice %172 {offsets = [0, 0], sizes = [8, 32], strides = [1, 1]} : vector<32x32xbf16> to vector<8x32xbf16>
      %cst_72 = arith.constant dense<0.000000e+00> : vector<8x32xf32>
      %205 = tpu.matmul %203, %204, %cst_72 {dimension_numbers = #tpu.dot_dimension_numbers<[1], [0], [0], [1], [0, 0, 1, 1], [], []>} : vector<8x8xbf16>, vector<8x32xbf16>, vector<8x32xf32> -> vector<8x32xf32>
      %206 = arith.addf %199, %205 : vector<8x32xf32>
      %207 = vector.extract_strided_slice %198 {offsets = [8, 0], sizes = [8, 8], strides = [1, 1]} : vector<32x8xbf16> to vector<8x8xbf16>
      %208 = vector.extract_strided_slice %171 {offsets = [0, 8], sizes = [8, 8], strides = [1, 1]} : vector<8x32xbf16> to vector<8x8xbf16>
      %cst_73 = arith.constant dense<0.000000e+00> : vector<8x8xf32>
      %209 = tpu.matmul %207, %208, %cst_73 {dimension_numbers = #tpu.dot_dimension_numbers<[1], [0], [0], [1], [0, 0, 1, 1], [], []>} : vector<8x8xbf16>, vector<8x8xbf16>, vector<8x8xf32> -> vector<8x8xf32>
      %210 = arith.truncf %209 : vector<8x8xf32> to vector<8x8xbf16>
      %211 = vector.extract_strided_slice %172 {offsets = [8, 0], sizes = [8, 32], strides = [1, 1]} : vector<32x32xbf16> to vector<8x32xbf16>
      %cst_74 = arith.constant dense<0.000000e+00> : vector<8x32xf32>
      %212 = tpu.matmul %210, %211, %cst_74 {dimension_numbers = #tpu.dot_dimension_numbers<[1], [0], [0], [1], [0, 0, 1, 1], [], []>} : vector<8x8xbf16>, vector<8x32xbf16>, vector<8x32xf32> -> vector<8x32xf32>
      %213 = arith.addf %206, %212 : vector<8x32xf32>
      %214 = vector.extract_strided_slice %198 {offsets = [16, 0], sizes = [8, 8], strides = [1, 1]} : vector<32x8xbf16> to vector<8x8xbf16>
      %215 = vector.extract_strided_slice %171 {offsets = [0, 16], sizes = [8, 8], strides = [1, 1]} : vector<8x32xbf16> to vector<8x8xbf16>
      %cst_75 = arith.constant dense<0.000000e+00> : vector<8x8xf32>
      %216 = tpu.matmul %214, %215, %cst_75 {dimension_numbers = #tpu.dot_dimension_numbers<[1], [0], [0], [1], [0, 0, 1, 1], [], []>} : vector<8x8xbf16>, vector<8x8xbf16>, vector<8x8xf32> -> vector<8x8xf32>
      %217 = arith.truncf %216 : vector<8x8xf32> to vector<8x8xbf16>
      %218 = vector.extract_strided_slice %172 {offsets = [16, 0], sizes = [8, 32], strides = [1, 1]} : vector<32x32xbf16> to vector<8x32xbf16>
      %cst_76 = arith.constant dense<0.000000e+00> : vector<8x32xf32>
      %219 = tpu.matmul %217, %218, %cst_76 {dimension_numbers = #tpu.dot_dimension_numbers<[1], [0], [0], [1], [0, 0, 1, 1], [], []>} : vector<8x8xbf16>, vector<8x32xbf16>, vector<8x32xf32> -> vector<8x32xf32>
      %220 = arith.addf %213, %219 : vector<8x32xf32>
      %221 = vector.extract_strided_slice %198 {offsets = [24, 0], sizes = [8, 8], strides = [1, 1]} : vector<32x8xbf16> to vector<8x8xbf16>
      %222 = vector.extract_strided_slice %171 {offsets = [0, 24], sizes = [8, 8], strides = [1, 1]} : vector<8x32xbf16> to vector<8x8xbf16>
      %cst_77 = arith.constant dense<0.000000e+00> : vector<8x8xf32>
      %223 = tpu.matmul %221, %222, %cst_77 {dimension_numbers = #tpu.dot_dimension_numbers<[1], [0], [0], [1], [0, 0, 1, 1], [], []>} : vector<8x8xbf16>, vector<8x8xbf16>, vector<8x8xf32> -> vector<8x8xf32>
      %224 = arith.truncf %223 : vector<8x8xf32> to vector<8x8xbf16>
      %225 = vector.extract_strided_slice %172 {offsets = [24, 0], sizes = [8, 32], strides = [1, 1]} : vector<32x32xbf16> to vector<8x32xbf16>
      %cst_78 = arith.constant dense<0.000000e+00> : vector<8x32xf32>
      %226 = tpu.matmul %224, %225, %cst_78 {dimension_numbers = #tpu.dot_dimension_numbers<[1], [0], [0], [1], [0, 0, 1, 1], [], []>} : vector<8x8xbf16>, vector<8x32xbf16>, vector<8x32xf32> -> vector<8x32xf32>
      %227 = arith.addf %220, %226 : vector<8x32xf32>
      %228 = arith.addf %149, %227 : vector<8x32xf32>
      %229 = vector.extract_strided_slice %73 {offsets = [2, 0], sizes = [1, 32], strides = [1, 1]} : vector<8x32xf32> to vector<1x32xf32>
      %230 = arith.mulf %228, %228 : vector<8x32xf32>
      %cst_79 = arith.constant dense<0.000000e+00> : vector<8xf32>
      %231 = vector.multi_reduction <add>, %230, %cst_79 [1] : vector<8x32xf32> to vector<8xf32>
      %232 = vector.shape_cast %231 : vector<8xf32> to vector<8x1xf32>
      %cst_80 = arith.constant 3.200000e+01 : f32
      %233 = vector.broadcast %cst_80 : f32 to vector<8x1xf32>
      %234 = arith.divf %232, %233 : vector<8x1xf32>
      %cst_81 = arith.constant 9.99999997E-7 : f32
      %235 = vector.broadcast %cst_81 : f32 to vector<8x1xf32>
      %236 = arith.addf %234, %235 : vector<8x1xf32>
      %237 = math.rsqrt %236 : vector<8x1xf32>
      %238 = vector.broadcast %237 : vector<8x1xf32> to vector<8x32xf32>
      %239 = arith.mulf %228, %238 : vector<8x32xf32>
      %240 = vector.broadcast %229 : vector<1x32xf32> to vector<8x32xf32>
      %241 = arith.mulf %239, %240 : vector<8x32xf32>
      %242 = arith.truncf %241 : vector<8x32xf32> to vector<8x32xbf16>
      %243 = vector.extract_strided_slice %67 {offsets = [0, 192], sizes = [32, 64], strides = [1, 1]} : vector<32x256xbf16> to vector<32x64xbf16>
      %cst_82 = arith.constant dense<0.000000e+00> : vector<8x64xf32>
      %244 = tpu.matmul %242, %243, %cst_82 {dimension_numbers = #tpu.dot_dimension_numbers<[1], [0], [0], [1], [0, 0, 1, 1], [], []>} : vector<8x32xbf16>, vector<32x64xbf16>, vector<8x64xf32> -> vector<8x64xf32>
      %cst_83 = arith.constant 0.000000e+00 : f32
      %245 = vector.broadcast %cst_83 : f32 to vector<8x64xf32>
      %246 = arith.maximumf %244, %245 : vector<8x64xf32>
      %247 = arith.truncf %246 : vector<8x64xf32> to vector<8x64xbf16>
      %248 = vector.extract_strided_slice %70 {offsets = [64, 0], sizes = [64, 32], strides = [1, 1]} : vector<128x32xbf16> to vector<64x32xbf16>
      %cst_84 = arith.constant dense<0.000000e+00> : vector<8x32xf32>
      %249 = tpu.matmul %247, %248, %cst_84 {dimension_numbers = #tpu.dot_dimension_numbers<[1], [0], [0], [1], [0, 0, 1, 1], [], []>} : vector<8x64xbf16>, vector<64x32xbf16>, vector<8x32xf32> -> vector<8x32xf32>
      %250 = arith.addf %228, %249 : vector<8x32xf32>
      scf.yield %250 : vector<8x32xf32>
    }
    %c2_i32_10 = arith.constant 2 : i32
    %c2 = arith.constant 2 : index
    %c0_11 = arith.constant 0 : index
    %c0_12 = arith.constant 0 : index
    %10 = vector.load %arg8[%c2, %c0_11, %c0_12] : memref<3x8x32xf32, #tpu.memory_space<vmem>>, vector<1x8x32xf32>
    %11 = vector.shape_cast %10 : vector<1x8x32xf32> to vector<8x32xf32>
    %12 = vector.extract_strided_slice %11 {offsets = [0, 0], sizes = [1, 32], strides = [1, 1]} : vector<8x32xf32> to vector<1x32xf32>
    %13 = arith.mulf %9, %9 : vector<8x32xf32>
    %cst = arith.constant dense<0.000000e+00> : vector<8xf32>
    %14 = vector.multi_reduction <add>, %13, %cst [1] : vector<8x32xf32> to vector<8xf32>
    %15 = vector.shape_cast %14 : vector<8xf32> to vector<8x1xf32>
    %cst_13 = arith.constant 3.200000e+01 : f32
    %16 = vector.broadcast %cst_13 : f32 to vector<8x1xf32>
    %17 = arith.divf %15, %16 : vector<8x1xf32>
    %cst_14 = arith.constant 9.99999997E-7 : f32
    %18 = vector.broadcast %cst_14 : f32 to vector<8x1xf32>
    %19 = arith.addf %17, %18 : vector<8x1xf32>
    %20 = math.rsqrt %19 : vector<8x1xf32>
    %21 = vector.broadcast %20 : vector<8x1xf32> to vector<8x32xf32>
    %22 = arith.mulf %9, %21 : vector<8x32xf32>
    %23 = vector.broadcast %12 : vector<1x32xf32> to vector<8x32xf32>
    %24 = arith.mulf %22, %23 : vector<8x32xf32>
    %cst_15 = arith.constant 0.176776692 : f32
    %25 = vector.broadcast %cst_15 : f32 to vector<8x32xf32>
    %26 = arith.mulf %24, %25 : vector<8x32xf32>
    %27 = arith.truncf %26 : vector<8x32xf32> to vector<8x32xbf16>
    %c0_16 = arith.constant 0 : index
    %c0_17 = arith.constant 0 : index
    %28 = vector.load %arg9[%c0_16, %c0_17] : memref<32x128xbf16, #tpu.memory_space<vmem>>, vector<32x128xbf16>
    %cst_18 = arith.constant dense<0.000000e+00> : vector<8x128xf32>
    %29 = tpu.matmul %27, %28, %cst_18 {dimension_numbers = #tpu.dot_dimension_numbers<[1], [0], [0], [1], [0, 0, 1, 1], [], []>} : vector<8x32xbf16>, vector<32x128xbf16>, vector<8x128xf32> -> vector<8x128xf32>
    %c0_19 = arith.constant 0 : index
    %c0_20 = arith.constant 0 : index
    %c0_21 = arith.constant 0 : index
    %30 = vector.load %arg10[%c0_19, %c0_20, %c0_21] : memref<1x8x128xf32, #tpu.memory_space<vmem>>, vector<1x8x128xf32>
    %31 = vector.shape_cast %30 : vector<1x8x128xf32> to vector<8x128xf32>
    %32 = vector.shape_cast %29 : vector<8x128xf32> to vector<1x8x128xf32>
    tpu.vector_store %arg10[%c0_19, %c0_20, %c0_21], %32 {strides = array<i32>} : memref<1x8x128xf32, #tpu.memory_space<vmem>>, vector<1x8x128xf32>,
    %c0_22 = arith.constant 0 : index
    %c0_23 = arith.constant 0 : index
    %c0_24 = arith.constant 0 : index
    %33 = vector.load %arg5[%c0_22, %c0_23, %c0_24] : memref<1x8x1xi32, #tpu.memory_space<vmem>>, vector<1x8x1xi32>
    %34 = vector.shape_cast %33 : vector<1x8x1xi32> to vector<8x1xi32>
    %cst_25 = arith.constant dense<0xFF800000> : vector<8xf32>
    %35 = vector.multi_reduction <maximumf>, %29, %cst_25 [1] : vector<8x128xf32> to vector<8xf32>
    %36 = vector.shape_cast %35 : vector<8xf32> to vector<8x1xf32>
    %37 = vector.broadcast %36 : vector<8x1xf32> to vector<8x128xf32>
    %38 = arith.subf %29, %37 : vector<8x128xf32>
    %39 = math.exp %38 : vector<8x128xf32>
    %cst_26 = arith.constant dense<0.000000e+00> : vector<8xf32>
    %40 = vector.multi_reduction <add>, %39, %cst_26 [1] : vector<8x128xf32> to vector<8xf32>
    %41 = vector.shape_cast %40 : vector<8xf32> to vector<8x1xf32>
    %42 = math.log %41 : vector<8x1xf32>
    %43 = arith.addf %42, %36 : vector<8x1xf32>
    %44 = tpu.iota {dimensions = array<i32: 1>} : vector<8x128xi32>
    %45 = vector.broadcast %34 : vector<8x1xi32> to vector<8x128xi32>
    %46 = arith.cmpi eq, %44, %45 : vector<8x128xi32>
    %cst_27 = arith.constant 0.000000e+00 : f32
    %47 = vector.broadcast %cst_27 : f32 to vector<8x128xf32>
    %48 = arith.select %46, %29, %47 : vector<8x128xi1>, vector<8x128xf32>
    %cst_28 = arith.constant dense<0.000000e+00> : vector<8xf32>
    %49 = vector.multi_reduction <add>, %48, %cst_28 [1] : vector<8x128xf32> to vector<8xf32>
    %50 = vector.shape_cast %49 : vector<8xf32> to vector<8x1xf32>
    %c-100_i32 = arith.constant -100 : i32
    %51 = vector.broadcast %c-100_i32 : i32 to vector<8x1xi32>
    %52 = arith.cmpi ne, %34, %51 : vector<8x1xi32>
    %53 = arith.extui %52 : vector<8x1xi1> to vector<8x1xi32>
    %54 = arith.sitofp %53 : vector<8x1xi32> to vector<8x1xf32>
    %55 = arith.subf %43, %50 : vector<8x1xf32>
    %56 = arith.mulf %55, %54 : vector<8x1xf32>
    %cst_29 = arith.constant dense<0.000000e+00> : vector<1xf32>
    %57 = vector.multi_reduction <add>, %56, %cst_29 [0] : vector<8x1xf32> to vector<1xf32>
    %58 = vector.shape_cast %57 : vector<1xf32> to vector<1x1xf32>
    %cst_30 = arith.constant dense<0.000000e+00> : vector<1xf32>
    %59 = vector.multi_reduction <add>, %54, %cst_30 [0] : vector<8x1xf32> to vector<1xf32>
    %60 = vector.shape_cast %59 : vector<1xf32> to vector<1x1xf32>
    %61 = tpu.concatenate %58, %60 in 1 : vector<1x1xf32>, vector<1x1xf32> -> vector<1x2xf32>
    %c0_31 = arith.constant 0 : index
    %c0_32 = arith.constant 0 : index
    %c0_33 = arith.constant 0 : index
    %62 = vector.load %arg11[%c0_31, %c0_32, %c0_33] : memref<1x1x2xf32, #tpu.memory_space<vmem>>, vector<1x1x2xf32>
    %63 = vector.shape_cast %62 : vector<1x1x2xf32> to vector<1x2xf32>
    %64 = vector.shape_cast %61 : vector<1x2xf32> to vector<1x1x2xf32>
    tpu.vector_store %arg11[%c0_31, %c0_32, %c0_33], %64 {strides = array<i32>} : memref<1x1x2xf32, #tpu.memory_space<vmem>>, vector<1x1x2xf32>,
    return
  }
  func.func @transform_0(%arg0: i32) -> (i32, i32, i32) {
    %c0_i32 = arith.constant 0 : i32
    %c0_i32_0 = arith.constant 0 : i32
    %c0_i32_1 = arith.constant 0 : i32
    return %arg0, %c0_i32, %c0_i32_0 : i32, i32, i32
  }
  func.func @transform_1(%arg0: i32) -> (i32, i32, i32) {
    %c0_i32 = arith.constant 0 : i32
    %c0_i32_0 = arith.constant 0 : i32
    %c0_i32_1 = arith.constant 0 : i32
    return %arg0, %c0_i32, %c0_i32_0 : i32, i32, i32
  }
  func.func @transform_2(%arg0: i32) -> (i32, i32) {
    %c0_i32 = arith.constant 0 : i32
    %c0_i32_0 = arith.constant 0 : i32
    %c0_i32_1 = arith.constant 0 : i32
    return %c0_i32, %c0_i32_0 : i32, i32
  }
  func.func @transform_3(%arg0: i32) -> (i32, i32, i32) {
    %c0_i32 = arith.constant 0 : i32
    %c0_i32_0 = arith.constant 0 : i32
    %c0_i32_1 = arith.constant 0 : i32
    return %arg0, %c0_i32, %c0_i32_0 : i32, i32, i32
  }
  func.func @transform_4(%arg0: i32) -> (i32, i32, i32) {
    %c0_i32 = arith.constant 0 : i32
    %c0_i32_0 = arith.constant 0 : i32
    %c0_i32_1 = arith.constant 0 : i32
    return %arg0, %c0_i32, %c0_i32_0 : i32, i32, i32
  }
  func.func @transform_5(%arg0: i32) -> (i32, i32, i32) {
    %c0_i32 = arith.constant 0 : i32
    %c0_i32_0 = arith.constant 0 : i32
    %c0_i32_1 = arith.constant 0 : i32
    %c0_i32_2 = arith.constant 0 : i32
    return %c0_i32, %c0_i32_0, %c0_i32_1 : i32, i32, i32
  }
  func.func @transform_6(%arg0: i32) -> (i32, i32, i32) {
    %c0_i32 = arith.constant 0 : i32
    %c0_i32_0 = arith.constant 0 : i32
    %c0_i32_1 = arith.constant 0 : i32
    %c0_i32_2 = arith.constant 0 : i32
    return %c0_i32, %c0_i32_0, %c0_i32_1 : i32, i32, i32
  }
  func.func @transform_7(%arg0: i32) -> (i32, i32, i32) {
    %c0_i32 = arith.constant 0 : i32
    %c0_i32_0 = arith.constant 0 : i32
    %c0_i32_1 = arith.constant 0 : i32
    %c0_i32_2 = arith.constant 0 : i32
    return %c0_i32, %c0_i32_0, %c0_i32_1 : i32, i32, i32
  }
  func.func @transform_8(%arg0: i32) -> (i32, i32) {
    %c0_i32 = arith.constant 0 : i32
    %c0_i32_0 = arith.constant 0 : i32
    %c0_i32_1 = arith.constant 0 : i32
    return %c0_i32, %c0_i32_0 : i32, i32
  }
  func.func @transform_9(%arg0: i32) -> (i32, i32, i32) {
    %c0_i32 = arith.constant 0 : i32
    %c0_i32_0 = arith.constant 0 : i32
    %c0_i32_1 = arith.constant 0 : i32
    return %arg0, %c0_i32, %c0_i32_0 : i32, i32, i32
  }
  func.func @transform_10(%arg0: i32) -> (i32, i32, i32) {
    %c0_i32 = arith.constant 0 : i32
    %c0_i32_0 = arith.constant 0 : i32
    %c0_i32_1 = arith.constant 0 : i32
    return %arg0, %c0_i32, %c0_i32_0 : i32, i32, i32
  }
}

</mosaic_0001>

<llo_original>
// kernel: encoder_vl_forward.1
$region0: #{encoder_vl_forward.1}
  #allocation0 [shape = 'u32[]', space=smem, size = 0x4, offset = 0x4, fixed_abs, tag = 'smem constant byte address 0x4 - core index']
  #allocation1 [shape = 'u32[144,128]{1,0:T(1,128)}', space=vmem, size = 0x12000, scoped, tag = 'internal scratch']
  %s0 = inlined_call_operand.vmem [shape: bf16[2,8,32], index: 0, kind: input, shape index: {}]
  %s1 = inlined_call_operand.vmem [shape: bf16[2,8,32], index: 1, kind: input, shape index: {}]
  %s2 = inlined_call_operand.vmem [shape: f32[32,8], index: 2, kind: input, shape index: {}]
  %s3 = inlined_call_operand.vmem [shape: f32[2,1,8], index: 3, kind: input, shape index: {}]
  %s4 = inlined_call_operand.vmem [shape: s32[2,8,1], index: 4, kind: input, shape index: {}]
  %s5 = inlined_call_operand.vmem [shape: bf16[2,32,256], index: 5, kind: input, shape index: {}]
  %s6 = inlined_call_operand.vmem [shape: bf16[2,128,32], index: 6, kind: input, shape index: {}]
  %s7 = inlined_call_operand.vmem [shape: f32[3,8,32], index: 7, kind: input, shape index: {}]
  %s8 = inlined_call_operand.vmem [shape: bf16[32,128], index: 8, kind: input, shape index: {}]
  %s9 = inlined_call_operand.hbm [shape: f32[2,8,128], index: 9, kind: output, shape index: {0}]
  %s10 = inlined_call_operand.vmem [shape: f32[2,1,2], index: 10, kind: output, shape index: {1}]
  %11 = xla_tuple %s9, %s10
  %s12 = sld [smem:[#allocation0]]
  $region84: #{encoder_vl_forward.1} parent=0
    _
  %s14 = ssub.s32 1, %s12
  %s15 = scalar_select 0, %s14, %s12
  $region1: #{encoder_vl_forward.1} parent=0
    #allocation2 [shape = 'u8[8192]{0}', space=vmem, size = 0x2000, scoped, tag = 'output window, operand 0']
    #allocation3 [shape = 's32[2]{0}', space=sflag, size = 0x8, scoped, tag = 'scoped memory for encoder_vl_forward.1']
    %16 = vsyncpa [#allocation3], 0
    %s17 = scalar_lea.sflag [#allocation3], 1
    %18 = vsyncpa %s17, 0
    loop: start=0, step=1, limit=4
    $region2: #{encoder_vl_forward.1} parent=1 // loop_pre_header
      _
    $region3: #{encoder_vl_forward.1} parent=1 // loop_header
      %s20 = sphi 0, %s24
      %p21 = scmp.ge.s32.totalorder %s20, 4
      %s30 = sphi 0, %s32
      %s33 = sphi 0, %s30
      %s34 = sphi 0, %s33
      %s50 = sphi 0, %s34
      %s56 = sphi 0, %s58
      %s59 = sphi 0, %s56
      %s60 = sphi 0, %s59
      %s76 = sphi 0, %s60
      %s80 = sphi 0, %s80
      %s82 = sphi 0, %s80
      %s83 = sphi 0, %s82
      %s97 = sphi 0, %s83
      %s103 = sphi 0, %s105
      %s106 = sphi 0, %s103
      %s107 = sphi 0, %s106
      %s123 = sphi 0, %s107
      %s129 = sphi 0, %s131
      %s132 = sphi 0, %s129
      %s133 = sphi 0, %s132
      %s149 = sphi 0, %s133
      %s153 = sphi 0, %s153
      %s155 = sphi 0, %s153
      %s156 = sphi 0, %s155
      %s170 = sphi 0, %s156
      %s174 = sphi 0, %s174
      %s176 = sphi 0, %s174
      %s177 = sphi 0, %s176
      %s191 = sphi 0, %s177
      %s195 = sphi 0, %s195
      %s197 = sphi 0, %s195
      %s198 = sphi 0, %s197
      %s212 = sphi 0, %s198
      %s216 = sphi 0, %s216
      %s218 = sphi 0, %s216
      %s219 = sphi 0, %s218
      %s233 = sphi 0, %s219
      %s239 = sphi 0, %s241
      %s242 = sphi 0, %s239
      %s243 = sphi 0, %s242
      %s259 = sphi 0, %s243
      %s265 = sphi 0, %s267
      %s268 = sphi 0, %s265
      %s269 = sphi 0, %s268
      %s285 = sphi 0, %s269
    $region4: #{encoder_vl_forward.1} parent=1 // loop_header_branch
      %23 = sbr.rel (%p21) target = $region8
    $region5: #{encoder_vl_forward.1} parent=1 // loop_body
      %s25 = ssub.s32 %s20, 1
      %s26 = ssub.s32 %s20, 2
      %s27 = sadd.s32 %s20, 1
      %s28 = ssub.s32 %s20, %s27
      %p29 = scmp.eq.s32.totalorder %s28, 0
      %s31 = sadd.s32 %s30, 1
      %s32 = scalar_select %p29, %s30, %s31
      %p35 = pneg %p29
      %p36 = scmp.eq.s32.totalorder %s20, 1
      %p37 = por %p35, %p36
      %p38 = scmp.ne.s32.totalorder %s30, %s33
      %p39 = scmp.eq.s32.totalorder %s20, 0
      %p40 = por %p38, %p39
      %p41 = scmp.ne.s32.totalorder %s30, %s33
      %p42 = scmp.eq.s32.totalorder %s25, 1
      %p43 = por %p41, %p42
      %p44 = scmp.ne.s32.totalorder %s33, %s34
      %p45 = scmp.eq.s32.totalorder %s25, 0
      %p46 = por %p44, %p45
      %p47 = scmp.ne.s32.totalorder %s33, %s34
      %p48 = scmp.eq.s32.totalorder %s26, 1
      %p49 = por %p47, %p48
      %p51 = scmp.ne.s32.totalorder %s34, %s50
      %p52 = scmp.eq.s32.totalorder %s26, 0
      %p53 = por %p51, %p52
      %s54 = ssub.s32 %s20, %s27
      %p55 = scmp.eq.s32.totalorder %s54, 0
      %s57 = sadd.s32 %s56, 1
      %s58 = scalar_select %p55, %s56, %s57
      %p61 = pneg %p55
      %p62 = scmp.eq.s32.totalorder %s20, 1
      %p63 = por %p61, %p62
      %p64 = scmp.ne.s32.totalorder %s56, %s59
      %p65 = scmp.eq.s32.totalorder %s20, 0
      %p66 = por %p64, %p65
      %p67 = scmp.ne.s32.totalorder %s56, %s59
      %p68 = scmp.eq.s32.totalorder %s25, 1
      %p69 = por %p67, %p68
      %p70 = scmp.ne.s32.totalorder %s59, %s60
      %p71 = scmp.eq.s32.totalorder %s25, 0
      %p72 = por %p70, %p71
      %p73 = scmp.ne.s32.totalorder %s59, %s60
      %p74 = scmp.eq.s32.totalorder %s26, 1
      %p75 = por %p73, %p74
      %p77 = scmp.ne.s32.totalorder %s60, %s76
      %p78 = scmp.eq.s32.totalorder %s26, 0
      %p79 = por %p77, %p78
      %s81 = sadd.s32 %s80, 1
      %p84 = scmp.eq.s32.totalorder %s20, 1
      %p85 = scmp.ne.s32.totalorder %s80, %s82
      %p86 = scmp.eq.s32.totalorder %s20, 0
      %p87 = por %p85, %p86
      %p88 = scmp.ne.s32.totalorder %s80, %s82
      %p89 = scmp.eq.s32.totalorder %s25, 1
      %p90 = por %p88, %p89
      %p91 = scmp.ne.s32.totalorder %s82, %s83
      %p92 = scmp.eq.s32.totalorder %s25, 0
      %p93 = por %p91, %p92
      %p94 = scmp.ne.s32.totalorder %s82, %s83
      %p95 = scmp.eq.s32.totalorder %s26, 1
      %p96 = por %p94, %p95
      %p98 = scmp.ne.s32.totalorder %s83, %s97
      %p99 = scmp.eq.s32.totalorder %s26, 0
      %p100 = por %p98, %p99
      %s101 = ssub.s32 %s20, %s27
      %p102 = scmp.eq.s32.totalorder %s101, 0
      %s104 = sadd.s32 %s103, 1
      %s105 = scalar_select %p102, %s103, %s104
      %p108 = pneg %p102
      %p109 = scmp.eq.s32.totalorder %s20, 1
      %p110 = por %p108, %p109
      %p111 = scmp.ne.s32.totalorder %s103, %s106
      %p112 = scmp.eq.s32.totalorder %s20, 0
      %p113 = por %p111, %p112
      %p114 = scmp.ne.s32.totalorder %s103, %s106
      %p115 = scmp.eq.s32.totalorder %s25, 1
      %p116 = por %p114, %p115
      %p117 = scmp.ne.s32.totalorder %s106, %s107
      %p118 = scmp.eq.s32.totalorder %s25, 0
      %p119 = por %p117, %p118
      %p120 = scmp.ne.s32.totalorder %s106, %s107
      %p121 = scmp.eq.s32.totalorder %s26, 1
      %p122 = por %p120, %p121
      %p124 = scmp.ne.s32.totalorder %s107, %s123
      %p125 = scmp.eq.s32.totalorder %s26, 0
      %p126 = por %p124, %p125
      %s127 = ssub.s32 %s20, %s27
      %p128 = scmp.eq.s32.totalorder %s127, 0
      %s130 = sadd.s32 %s129, 1
      %s131 = scalar_select %p128, %s129, %s130
      %p134 = pneg %p128
      %p135 = scmp.eq.s32.totalorder %s20, 1
      %p136 = por %p134, %p135
      %p137 = scmp.ne.s32.totalorder %s129, %s132
      %p138 = scmp.eq.s32.totalorder %s20, 0
      %p139 = por %p137, %p138
      %p140 = scmp.ne.s32.totalorder %s129, %s132
      %p141 = scmp.eq.s32.totalorder %s25, 1
      %p142 = por %p140, %p141
      %p143 = scmp.ne.s32.totalorder %s132, %s133
      %p144 = scmp.eq.s32.totalorder %s25, 0
      %p145 = por %p143, %p144
      %p146 = scmp.ne.s32.totalorder %s132, %s133
      %p147 = scmp.eq.s32.totalorder %s26, 1
      %p148 = por %p146, %p147
      %p150 = scmp.ne.s32.totalorder %s133, %s149
      %p151 = scmp.eq.s32.totalorder %s26, 0
      %p152 = por %p150, %p151
      %s154 = sadd.s32 %s153, 1
      %p157 = scmp.eq.s32.totalorder %s20, 1
      %p158 = scmp.ne.s32.totalorder %s153, %s155
      %p159 = scmp.eq.s32.totalorder %s20, 0
      %p160 = por %p158, %p159
      %p161 = scmp.ne.s32.totalorder %s153, %s155
      %p162 = scmp.eq.s32.totalorder %s25, 1
      %p163 = por %p161, %p162
      %p164 = scmp.ne.s32.totalorder %s155, %s156
      %p165 = scmp.eq.s32.totalorder %s25, 0
      %p166 = por %p164, %p165
      %p167 = scmp.ne.s32.totalorder %s155, %s156
      %p168 = scmp.eq.s32.totalorder %s26, 1
      %p169 = por %p167, %p168
      %p171 = scmp.ne.s32.totalorder %s156, %s170
      %p172 = scmp.eq.s32.totalorder %s26, 0
      %p173 = por %p171, %p172
      %s175 = sadd.s32 %s174, 1
      %p178 = scmp.eq.s32.totalorder %s20, 1
      %p179 = scmp.ne.s32.totalorder %s174, %s176
      %p180 = scmp.eq.s32.totalorder %s20, 0
      %p181 = por %p179, %p180
      %p182 = scmp.ne.s32.totalorder %s174, %s176
      %p183 = scmp.eq.s32.totalorder %s25, 1
      %p184 = por %p182, %p183
      %p185 = scmp.ne.s32.totalorder %s176, %s177
      %p186 = scmp.eq.s32.totalorder %s25, 0
      %p187 = por %p185, %p186
      %p188 = scmp.ne.s32.totalorder %s176, %s177
      %p189 = scmp.eq.s32.totalorder %s26, 1
      %p190 = por %p188, %p189
      %p192 = scmp.ne.s32.totalorder %s177, %s191
      %p193 = scmp.eq.s32.totalorder %s26, 0
      %p194 = por %p192, %p193
      %s196 = sadd.s32 %s195, 1
      %p199 = scmp.eq.s32.totalorder %s20, 1
      %p200 = scmp.ne.s32.totalorder %s195, %s197
      %p201 = scmp.eq.s32.totalorder %s20, 0
      %p202 = por %p200, %p201
      %p203 = scmp.ne.s32.totalorder %s195, %s197
      %p204 = scmp.eq.s32.totalorder %s25, 1
      %p205 = por %p203, %p204
      %p206 = scmp.ne.s32.totalorder %s197, %s198
      %p207 = scmp.eq.s32.totalorder %s25, 0
      %p208 = por %p206, %p207
      %p209 = scmp.ne.s32.totalorder %s197, %s198
      %p210 = scmp.eq.s32.totalorder %s26, 1
      %p211 = por %p209, %p210
      %p213 = scmp.ne.s32.totalorder %s198, %s212
      %p214 = scmp.eq.s32.totalorder %s26, 0
      %p215 = por %p213, %p214
      %s217 = sadd.s32 %s216, 1
      %p220 = scmp.eq.s32.totalorder %s20, 1
      %p221 = scmp.ne.s32.totalorder %s216, %s218
      %p222 = scmp.eq.s32.totalorder %s20, 0
      %p223 = por %p221, %p222
      %p224 = scmp.ne.s32.totalorder %s216, %s218
      %p225 = scmp.eq.s32.totalorder %s25, 1
      %p226 = por %p224, %p225
      %p227 = scmp.ne.s32.totalorder %s218, %s219
      %p228 = scmp.eq.s32.totalorder %s25, 0
      %p229 = por %p227, %p228
      %p230 = scmp.ne.s32.totalorder %s218, %s219
      %p231 = scmp.eq.s32.totalorder %s26, 1
      %p232 = por %p230, %p231
      %p234 = scmp.ne.s32.totalorder %s219, %s233
      %p235 = scmp.eq.s32.totalorder %s26, 0
      %p236 = por %p234, %p235
      %s237 = ssub.s32 %s20, %s27
      %p238 = scmp.eq.s32.totalorder %s237, 0
      %s240 = sadd.s32 %s239, 1
      %s241 = scalar_select %p238, %s239, %s240
      %p244 = pneg %p238
      %p245 = scmp.eq.s32.totalorder %s20, 1
      %p246 = por %p244, %p245
      %p247 = scmp.ne.s32.totalorder %s239, %s242
      %p248 = scmp.eq.s32.totalorder %s20, 0
      %p249 = por %p247, %p248
      %p250 = scmp.ne.s32.totalorder %s239, %s242
      %p251 = scmp.eq.s32.totalorder %s25, 1
      %p252 = por %p250, %p251
      %p253 = scmp.ne.s32.totalorder %s242, %s243
      %p254 = scmp.eq.s32.totalorder %s25, 0
      %p255 = por %p253, %p254
      %p256 = scmp.ne.s32.totalorder %s242, %s243
      %p257 = scmp.eq.s32.totalorder %s26, 1
      %p258 = por %p256, %p257
      %p260 = scmp.ne.s32.totalorder %s243, %s259
      %p261 = scmp.eq.s32.totalorder %s26, 0
      %p262 = por %p260, %p261
      %s263 = ssub.s32 %s20, %s27
      %p264 = scmp.eq.s32.totalorder %s263, 0
      %s266 = sadd.s32 %s265, 1
      %s267 = scalar_select %p264, %s265, %s266
      %p270 = pneg %p264
      %p271 = scmp.eq.s32.totalorder %s20, 1
      %p272 = por %p270, %p271
      %p273 = scmp.ne.s32.totalorder %s265, %s268
      %p274 = scmp.eq.s32.totalorder %s20, 0
      %p275 = por %p273, %p274
      %p276 = scmp.ne.s32.totalorder %s265, %s268
      %p277 = scmp.eq.s32.totalorder %s25, 1
      %p278 = por %p276, %p277
      %p279 = scmp.ne.s32.totalorder %s268, %s269
      %p280 = scmp.eq.s32.totalorder %s25, 0
      %p281 = por %p279, %p280
      %p282 = scmp.ne.s32.totalorder %s268, %s269
      %p283 = scmp.eq.s32.totalorder %s26, 1
      %p284 = por %p282, %p283
      %p286 = scmp.ne.s32.totalorder %s269, %s285
      %p287 = scmp.eq.s32.totalorder %s26, 0
      %p288 = por %p286, %p287
      %p289 = scmp.le.s32.totalorder 1, %s20
      %p290 = scmp.lt.s32.totalorder %s20, 3
      %p291 = pnand %p289, %p290
      %p292 = pneg %p291
      // Predicated region
      $region9: #{encoder_vl_forward.1} parent=5 // pred_check
        _
      $region10: #{encoder_vl_forward.1} parent=5 // pred_check_branch
        %294 = sbr.rel (%p291) target = $region12
      $region11: #{encoder_vl_forward.1} parent=5 // pred_region
        %s295 = ssub.s32 %s20, 1
        // Predicated region
        $region13: #{encoder_vl_forward.1} parent=11 // pred_check
          %p296 = pneg %p93
        $region14: #{encoder_vl_forward.1} parent=11 // pred_check_branch
          %298 = sbr.rel (%p296) target = $region16
        $region15: #{encoder_vl_forward.1} parent=11 // pred_region
          _
        $region16: #{encoder_vl_forward.1} parent=11 // pred_fallthru
          _
        // Predicated region
        $region17: #{encoder_vl_forward.1} parent=11 // pred_check
          %p299 = pneg %p166
        $region18: #{encoder_vl_forward.1} parent=11 // pred_check_branch
          %301 = sbr.rel (%p299) target = $region20
        $region19: #{encoder_vl_forward.1} parent=11 // pred_region
          _
        $region20: #{encoder_vl_forward.1} parent=11 // pred_fallthru
          _
        // Predicated region
        $region21: #{encoder_vl_forward.1} parent=11 // pred_check
          %p302 = pneg %p187
        $region22: #{encoder_vl_forward.1} parent=11 // pred_check_branch
          %304 = sbr.rel (%p302) target = $region24
        $region23: #{encoder_vl_forward.1} parent=11 // pred_region
          _
        $region24: #{encoder_vl_forward.1} parent=11 // pred_fallthru
          _
        // Predicated region
        $region25: #{encoder_vl_forward.1} parent=11 // pred_check
          %p305 = pneg %p208
        $region26: #{encoder_vl_forward.1} parent=11 // pred_check_branch
          %307 = sbr.rel (%p305) target = $region28
        $region27: #{encoder_vl_forward.1} parent=11 // pred_region
          _
        $region28: #{encoder_vl_forward.1} parent=11 // pred_fallthru
          _
        // Predicated region
        $region29: #{encoder_vl_forward.1} parent=11 // pred_check
          %p308 = pneg %p229
        $region30: #{encoder_vl_forward.1} parent=11 // pred_check_branch
          %310 = sbr.rel (%p308) target = $region32
        $region31: #{encoder_vl_forward.1} parent=11 // pred_region
          _
        $region32: #{encoder_vl_forward.1} parent=11 // pred_fallthru
          _
      $region12: #{encoder_vl_forward.1} parent=5 // pred_fallthru
        _
      %p311 = scmp.lt.s32.totalorder %s20, 2
      // Predicated region
      $region33: #{encoder_vl_forward.1} parent=5 // pred_check
        %p312 = pneg %p311
      $region34: #{encoder_vl_forward.1} parent=5 // pred_check_branch
        %314 = sbr.rel (%p312) target = $region36
      $region35: #{encoder_vl_forward.1} parent=5 // pred_region
        // Predicated region
        $region37: #{encoder_vl_forward.1} parent=35 // pred_check
          %p315 = pneg %p40
        $region38: #{encoder_vl_forward.1} parent=35 // pred_check_branch
          %317 = sbr.rel (%p315) target = $region40
        $region39: #{encoder_vl_forward.1} parent=35 // pred_region
          %p318 = scmp.lt.s32.totalorder %s20, 1
          %s319 = scalar_select %p318, %s20, 1
          %s320 = smul.addr %s319, 4
          %s321 = scalar_lea.vmem %s0, %s320
        $region40: #{encoder_vl_forward.1} parent=35 // pred_fallthru
          _
        // Predicated region
        $region41: #{encoder_vl_forward.1} parent=35 // pred_check
          %p322 = pneg %p66
        $region42: #{encoder_vl_forward.1} parent=35 // pred_check_branch
          %324 = sbr.rel (%p322) target = $region44
        $region43: #{encoder_vl_forward.1} parent=35 // pred_region
          %p325 = scmp.lt.s32.totalorder %s20, 1
          %s326 = scalar_select %p325, %s20, 1
          %s327 = smul.addr %s326, 4
          %s328 = scalar_lea.vmem %s1, %s327
        $region44: #{encoder_vl_forward.1} parent=35 // pred_fallthru
          _
        // Predicated region
        $region45: #{encoder_vl_forward.1} parent=35 // pred_check
          %p329 = pneg %p113
        $region46: #{encoder_vl_forward.1} parent=35 // pred_check_branch
          %331 = sbr.rel (%p329) target = $region48
        $region47: #{encoder_vl_forward.1} parent=35 // pred_region
          %p332 = scmp.lt.s32.totalorder %s20, 1
          %s333 = scalar_select %p332, %s20, 1
          %s334 = scalar_lea.vmem %s3, %s333
        $region48: #{encoder_vl_forward.1} parent=35 // pred_fallthru
          _
        // Predicated region
        $region49: #{encoder_vl_forward.1} parent=35 // pred_check
          %p335 = pneg %p139
        $region50: #{encoder_vl_forward.1} parent=35 // pred_check_branch
          %337 = sbr.rel (%p335) target = $region52
        $region51: #{encoder_vl_forward.1} parent=35 // pred_region
          %p338 = scmp.lt.s32.totalorder %s20, 1
          %s339 = scalar_select %p338, %s20, 1
          %s340 = smul.addr %s339, 8
          %s341 = scalar_lea.vmem %s4, %s340
        $region52: #{encoder_vl_forward.1} parent=35 // pred_fallthru
          _
      $region36: #{encoder_vl_forward.1} parent=5 // pred_fallthru
        _
      %p342 = scmp.le.s32.totalorder 1, %s20
      %p343 = scmp.lt.s32.totalorder %s20, 3
      %p344 = pnand %p342, %p343
      %p345 = pneg %p344
      // Predicated region
      $region53: #{encoder_vl_forward.1} parent=5 // pred_check
        _
      $region54: #{encoder_vl_forward.1} parent=5 // pred_check_branch
        %347 = sbr.rel (%p344) target = $region56
      $region55: #{encoder_vl_forward.1} parent=5 // pred_region
        %s348 = ssub.s32 %s20, 1
        %p349 = scmp.lt.s32.totalorder %s25, 1
        %s350 = scalar_select %p349, %s25, 1
        %s351 = smul.addr %s350, 4
        %s352 = scalar_lea.vmem %s0, %s351
        %p353 = pneg %p46
        %p354 = pneg %p43
        %p355 = scmp.lt.s32.totalorder %s25, 1
        %s356 = scalar_select %p355, %s25, 1
        %s357 = smul.addr %s356, 4
        %s358 = scalar_lea.vmem %s1, %s357
        %p359 = pneg %p72
        %p360 = pneg %p69
        %p361 = pneg %p93
        %p362 = pneg %p90
        %p363 = scmp.lt.s32.totalorder %s25, 1
        %s364 = scalar_select %p363, %s25, 1
        %s365 = scalar_lea.vmem %s3, %s364
        %p366 = pneg %p119
        %p367 = pneg %p116
        %p368 = scmp.lt.s32.totalorder %s25, 1
        %s369 = scalar_select %p368, %s25, 1
        %s370 = smul.addr %s369, 8
        %s371 = scalar_lea.vmem %s4, %s370
        %p372 = pneg %p145
        %p373 = pneg %p142
        %p374 = pneg %p166
        %p375 = pneg %p163
        %p376 = pneg %p187
        %p377 = pneg %p184
        %p378 = pneg %p208
        %p379 = pneg %p205
        %p380 = pneg %p229
        %p381 = pneg %p226
        %p382 = pneg %p255
        %p383 = pneg %p252
        %s384 = sand.u32 %s242, 1
        %s385 = scalar_lea.sflag [#allocation3], %s384
        %s386 = sand.u32 %s242, 1
        %s387 = smul.addr %s386, 8
        %s388 = scalar_lea.vmem [#allocation2], %s387
        %p389 = pneg %p281
        %p390 = pneg %p278
        %p391 = scmp.lt.s32.totalorder %s25, 1
        %s392 = scalar_select %p391, %s25, 1
        %s393 = scalar_lea.vmem %s10, %s392
        %p394 = scmp.lt.s32.totalorder %s25, 1
        %s395 = scalar_select %p394, %s25, 1
        %s396 = smul.addr %s395, 4
        %s397 = scalar_lea.vmem %s0, %s396
        %p398 = scmp.lt.s32.totalorder %s25, 1
        %s399 = scalar_select %p398, %s25, 1
        %s400 = smul.addr %s399, 4
        %s401 = scalar_lea.vmem %s1, %s400
        %p402 = scmp.lt.s32.totalorder %s25, 1
        %s403 = scalar_select %p402, %s25, 1
        %s404 = scalar_lea.vmem %s3, %s403
        %p405 = scmp.lt.s32.totalorder %s25, 1
        %s406 = scalar_select %p405, %s25, 1
        %s407 = smul.addr %s406, 8
        %s408 = scalar_lea.vmem %s4, %s407
        %p409 = scmp.lt.s32.totalorder %s25, 1
        %s410 = scalar_select %p409, %s25, 1
        %s411 = scalar_lea.vmem %s10, %s410
        %v413 = vld [vmem:[%s397] sm:$0xf]
        %v414 = vunpack.c.l.bf16 %v413
        %v415 = vld [vmem:[%s401] sm:$0xf]
        %v416 = vld [vmem:[%s2] sm:$0xff]
        %v417 = vld [vmem:[%s2 + $0x8] sm:$0xff]
        %v418 = vld [vmem:[%s2 + $0x10] sm:$0xff]
        %v419 = vld [vmem:[%s2 + $0x18] sm:$0xff]
        %v420 = vld [vmem:[%s404] sm:$0x1]
        loop: start=0, step=1, limit=2
        $region57: #{encoder_vl_forward.1} parent=55 // loop_pre_header
          _
        $region58: #{encoder_vl_forward.1} parent=55 // loop_header
          %s422 = sphi 0, %s426
          %p423 = scmp.ge.s32.totalorder %s422, 2
          %v427 = vphi %v414, %v2056
        $region59: #{encoder_vl_forward.1} parent=55 // loop_header_branch
          %425 = sbr.rel (%p423) target = $region63
        $region60: #{encoder_vl_forward.1} parent=55 // loop_body
          %s428 = smul.u32 %s422, 8
          %s429 = smul.addr %s428, 4
          %s430 = scalar_lea.vmem %s5, %s429
          %v431 = vld [vmem:[%s430] sm:$0xff]
          %v432 = vld [vmem:[%s430 + $0x8] sm:$0xff]
          %v433 = vld [vmem:[%s430 + $0x10] sm:$0xff]
          %v434 = vld [vmem:[%s430 + $0x18] sm:$0xff]
          %s435 = smul.u32 %s422, 16
          %s436 = smul.addr %s435, 4
          %s437 = scalar_lea.vmem %s6, %s436
          %v438 = vld [vmem:[%s437] sm:$0xf]
          %v439 = vld [vmem:[%s437 + $0x4] sm:$0xf]
          %v440 = vld [vmem:[%s437 + $0x8] sm:$0xf]
          %v441 = vld [vmem:[%s437 + $0xc] sm:$0xf]
          %v442 = vld [vmem:[%s437 + $0x10] sm:$0xf]
          %v443 = vld [vmem:[%s437 + $0x14] sm:$0xf]
          %v444 = vld [vmem:[%s437 + $0x18] sm:$0xf]
          %v445 = vld [vmem:[%s437 + $0x1c] sm:$0xf]
          %v446 = vld [vmem:[%s437 + $0x20] sm:$0xf]
          %v447 = vld [vmem:[%s437 + $0x24] sm:$0xf]
          %v448 = vld [vmem:[%s437 + $0x28] sm:$0xf]
          %v449 = vld [vmem:[%s437 + $0x2c] sm:$0xf]
          %v450 = vld [vmem:[%s437 + $0x30] sm:$0xf]
          %v451 = vld [vmem:[%s437 + $0x34] sm:$0xf]
          %v452 = vld [vmem:[%s437 + $0x38] sm:$0xf]
          %v453 = vld [vmem:[%s437 + $0x3c] sm:$0xf]
          %s454 = scalar_lea.vmem %s7, %s428
          %v455 = vld [vmem:[%s454] sm:$0xff]
          %v456 = vmul.f32 %v427, %v427
          %vm457 = vcmask 261120
          %v458 = vsel %vm457, %v456, 0.0
          %459 = vadd.xlane.f32.xlu0 %v458
          %v460 = vpop.xlane.xlu0 %459
          %v461 = vrcp.pop 32.0
          %v462 = vmul.f32 %v460, %v461
          %v463 = vadd.f32 %v462, 1e-06
          %v464 = vrsqrt.pop %v463
          %v465 = vmul.f32 %v427, %v464
          %v466 = vlaneseq
          %v467 = vshrl.u32 %v466, 7
          %v468 = vsub.s32 0, %v467
          %v469 = vrot.slane %v455, %v468
          %v470 = vmul.f32 %v465, %v469
          %v471 = vpack.c.bf16 %v470, %v470
          %v476 = vunpack.c.l.b16 %v431
          %v477 = vunpack.c.l.b16 %v432
          %v478 = vunpack.c.l.b16 %v433
          %v479 = vunpack.c.l.b16 %v434
          %v480 = vpack.c.b16 %v477, %v476
          %v481 = vpack.c.b16 %v479, %v478
          %v485 = vsel %vm457, %v471, 0
          %487 = vmatprep.subr.bf16.mxu0 0
          %488 = vmatpush1.bf16.msra.mxu0 %v480
          %489 = vmatprep.subr.bf16.mxu0 0
          %490 = vmatpush1.bf16.msra.mxu0 %v481
          %491 = vmatprep.subr.bf16.mxu0 0
          %492 = vmatpush1.bf16.msra.mxu0 0
          %493 = vmatprep.subr.bf16.mxu0 0
          %494 = vmatpush1.bf16.msra.mxu0 0
          %495 = vmatprep.subr.bf16.mxu0 0
          %496 = vmatpush1.bf16.msra.mxu0 0
          %497 = vmatprep.subr.bf16.mxu0 0
          %498 = vmatpush1.bf16.msra.mxu0 0
          %499 = vmatprep.subr.bf16.mxu0 0
          %500 = vmatpush1.bf16.msra.mxu0 0
          %501 = vmatprep.subr.bf16.mxu0 0
          %502 = vmatpush1.bf16.msra.mxu0 0
          %503 = vmatprep.subr.bf16.mxu0 0
          %504 = vmatpush1.bf16.msra.mxu0 0
          %505 = vmatprep.subr.bf16.mxu0 0
          %506 = vmatpush1.bf16.msra.mxu0 0
          %507 = vmatprep.subr.bf16.mxu0 0
          %508 = vmatpush1.bf16.msra.mxu0 0
          %509 = vmatprep.subr.bf16.mxu0 0
          %510 = vmatpush1.bf16.msra.mxu0 0
          %511 = vmatprep.subr.bf16.mxu0 0
          %512 = vmatpush1.bf16.msra.mxu0 0
          %513 = vmatprep.subr.bf16.mxu0 0
          %514 = vmatpush1.bf16.msra.mxu0 0
          %515 = vmatprep.subr.bf16.mxu0 0
          %516 = vmatpush1.bf16.msra.mxu0 0
          %517 = vmatprep.subr.bf16.mxu0 0
          %518 = vmatpush1.bf16.msra.mxu0 0
          %519 = vmatprep.mubr.bf16.mxu0 0
          %520 = vmatmul.mubr.bf16.gmra.mrb[0].mxu0 %v485
          %v521 = vpop.f32.mrb[0].mxu0
          %v522 = vadd.f32 0.0, %v521
          %v523 = vpop.f32.mrb[0].mxu0
          %v524 = vpop.f32.mrb[0].mxu0
          %v525 = vpop.f32.mrb[0].mxu0
          %526 = vdwg.mxu0
          %v527 = vpack.c.bf16 %v522, %v522
          %529 = vrot.lane.b32.xlu0 %v527, 96
          %v530 = vpop.permute.xlu0 %529
          %vm531 = vcmask 64512
          %v533 = vsel %vm531, %v527, 0
          %v536 = vsel %vm531, %v530, 0
          %538 = vmatprep.subr.bf16.mxu0 0
          %539 = vmatpush1.bf16.xpose.msra.mxu0 %v536
          %540 = vmatprep.subr.bf16.mxu0 0
          %541 = vmatpush1.bf16.xpose.msra.mxu0 0
          %542 = vmatprep.subr.bf16.mxu0 0
          %543 = vmatpush1.bf16.xpose.msra.mxu0 0
          %544 = vmatprep.subr.bf16.mxu0 0
          %545 = vmatpush1.bf16.xpose.msra.mxu0 0
          %546 = vmatprep.subr.bf16.mxu0 0
          %547 = vmatpush1.bf16.xpose.msra.mxu0 0
          %548 = vmatprep.subr.bf16.mxu0 0
          %549 = vmatpush1.bf16.xpose.msra.mxu0 0
          %550 = vmatprep.subr.bf16.mxu0 0
          %551 = vmatpush1.bf16.xpose.msra.mxu0 0
          %552 = vmatprep.subr.bf16.mxu0 0
          %553 = vmatpush1.bf16.xpose.msra.mxu0 0
          %554 = vmatprep.subr.bf16.mxu0 0
          %555 = vmatpush1.bf16.xpose.msra.mxu0 0
          %556 = vmatprep.subr.bf16.mxu0 0
          %557 = vmatpush1.bf16.xpose.msra.mxu0 0
          %558 = vmatprep.subr.bf16.mxu0 0
          %559 = vmatpush1.bf16.xpose.msra.mxu0 0
          %560 = vmatprep.subr.bf16.mxu0 0
          %561 = vmatpush1.bf16.xpose.msra.mxu0 0
          %562 = vmatprep.subr.bf16.mxu0 0
          %563 = vmatpush1.bf16.xpose.msra.mxu0 0
          %564 = vmatprep.subr.bf16.mxu0 0
          %565 = vmatpush1.bf16.xpose.msra.mxu0 0
          %566 = vmatprep.subr.bf16.mxu0 0
          %567 = vmatpush1.bf16.xpose.msra.mxu0 0
          %568 = vmatprep.subr.bf16.mxu0 0
          %569 = vmatpush1.bf16.xpose.msra.mxu0 0
          %570 = vmatprep.mubr.bf16.mxu0 0
          %571 = vmatmul.mubr.bf16.gmra.mrb[0].mxu0 %v533
          %v572 = vpop.f32.mrb[0].mxu0
          %v573 = vadd.f32 0.0, %v572
          %v574 = vpop.f32.mrb[0].mxu0
          %v575 = vpop.f32.mrb[0].mxu0
          %v576 = vpop.f32.mrb[0].mxu0
          %577 = vdwg.mxu0
          %578 = vrot.lane.b32.xlu0 %v527, 120
          %v579 = vpop.permute.xlu0 %578
          %580 = vrot.lane.b32.xlu0 %v527, 88
          %v581 = vpop.permute.xlu0 %580
          %v583 = vsel %vm531, %v579, 0
          %v586 = vsel %vm531, %v581, 0
          %588 = vmatprep.subr.bf16.mxu0 0
          %589 = vmatpush1.bf16.xpose.msra.mxu0 %v586
          %590 = vmatprep.subr.bf16.mxu0 0
          %591 = vmatpush1.bf16.xpose.msra.mxu0 0
          %592 = vmatprep.subr.bf16.mxu0 0
          %593 = vmatpush1.bf16.xpose.msra.mxu0 0
          %594 = vmatprep.subr.bf16.mxu0 0
          %595 = vmatpush1.bf16.xpose.msra.mxu0 0
          %596 = vmatprep.subr.bf16.mxu0 0
          %597 = vmatpush1.bf16.xpose.msra.mxu0 0
          %598 = vmatprep.subr.bf16.mxu0 0
          %599 = vmatpush1.bf16.xpose.msra.mxu0 0
          %600 = vmatprep.subr.bf16.mxu0 0
          %601 = vmatpush1.bf16.xpose.msra.mxu0 0
          %602 = vmatprep.subr.bf16.mxu0 0
          %603 = vmatpush1.bf16.xpose.msra.mxu0 0
          %604 = vmatprep.subr.bf16.mxu0 0
          %605 = vmatpush1.bf16.xpose.msra.mxu0 0
          %606 = vmatprep.subr.bf16.mxu0 0
          %607 = vmatpush1.bf16.xpose.msra.mxu0 0
          %608 = vmatprep.subr.bf16.mxu0 0
          %609 = vmatpush1.bf16.xpose.msra.mxu0 0
          %610 = vmatprep.subr.bf16.mxu0 0
          %611 = vmatpush1.bf16.xpose.msra.mxu0 0
          %612 = vmatprep.subr.bf16.mxu0 0
          %613 = vmatpush1.bf16.xpose.msra.mxu0 0
          %614 = vmatprep.subr.bf16.mxu0 0
          %615 = vmatpush1.bf16.xpose.msra.mxu0 0
          %616 = vmatprep.subr.bf16.mxu0 0
          %617 = vmatpush1.bf16.xpose.msra.mxu0 0
          %618 = vmatprep.subr.bf16.mxu0 0
          %619 = vmatpush1.bf16.xpose.msra.mxu0 0
          %620 = vmatprep.mubr.bf16.mxu0 0
          %621 = vmatmul.mubr.bf16.gmra.mrb[0].mxu0 %v583
          %v622 = vpop.f32.mrb[0].mxu0
          %v623 = vadd.f32 0.0, %v622
          %v624 = vpop.f32.mrb[0].mxu0
          %v625 = vpop.f32.mrb[0].mxu0
          %v626 = vpop.f32.mrb[0].mxu0
          %627 = vdwg.mxu0
          %628 = vrot.lane.b32.xlu0 %v527, 112
          %v629 = vpop.permute.xlu0 %628
          %630 = vrot.lane.b32.xlu0 %v527, 80
          %v631 = vpop.permute.xlu0 %630
          %v633 = vsel %vm531, %v629, 0
          %v636 = vsel %vm531, %v631, 0
          %638 = vmatprep.subr.bf16.mxu0 0
          %639 = vmatpush1.bf16.xpose.msra.mxu0 %v636
          %640 = vmatprep.subr.bf16.mxu0 0
          %641 = vmatpush1.bf16.xpose.msra.mxu0 0
          %642 = vmatprep.subr.bf16.mxu0 0
          %643 = vmatpush1.bf16.xpose.msra.mxu0 0
          %644 = vmatprep.subr.bf16.mxu0 0
          %645 = vmatpush1.bf16.xpose.msra.mxu0 0
          %646 = vmatprep.subr.bf16.mxu0 0
          %647 = vmatpush1.bf16.xpose.msra.mxu0 0
          %648 = vmatprep.subr.bf16.mxu0 0
          %649 = vmatpush1.bf16.xpose.msra.mxu0 0
          %650 = vmatprep.subr.bf16.mxu0 0
          %651 = vmatpush1.bf16.xpose.msra.mxu0 0
          %652 = vmatprep.subr.bf16.mxu0 0
          %653 = vmatpush1.bf16.xpose.msra.mxu0 0
          %654 = vmatprep.subr.bf16.mxu0 0
          %655 = vmatpush1.bf16.xpose.msra.mxu0 0
          %656 = vmatprep.subr.bf16.mxu0 0
          %657 = vmatpush1.bf16.xpose.msra.mxu0 0
          %658 = vmatprep.subr.bf16.mxu0 0
          %659 = vmatpush1.bf16.xpose.msra.mxu0 0
          %660 = vmatprep.subr.bf16.mxu0 0
          %661 = vmatpush1.bf16.xpose.msra.mxu0 0
          %662 = vmatprep.subr.bf16.mxu0 0
          %663 = vmatpush1.bf16.xpose.msra.mxu0 0
          %664 = vmatprep.subr.bf16.mxu0 0
          %665 = vmatpush1.bf16.xpose.msra.mxu0 0
          %666 = vmatprep.subr.bf16.mxu0 0
          %667 = vmatpush1.bf16.xpose.msra.mxu0 0
          %668 = vmatprep.subr.bf16.mxu0 0
          %669 = vmatpush1.bf16.xpose.msra.mxu0 0
          %670 = vmatprep.mubr.bf16.mxu0 0
          %671 = vmatmul.mubr.bf16.gmra.mrb[0].mxu0 %v633
          %v672 = vpop.f32.mrb[0].mxu0
          %v673 = vadd.f32 0.0, %v672
          %v674 = vpop.f32.mrb[0].mxu0
          %v675 = vpop.f32.mrb[0].mxu0
          %v676 = vpop.f32.mrb[0].mxu0
          %677 = vdwg.mxu0
          %678 = vrot.lane.b32.xlu0 %v527, 104
          %v679 = vpop.permute.xlu0 %678
          %680 = vrot.lane.b32.xlu0 %v527, 72
          %v681 = vpop.permute.xlu0 %680
          %v683 = vsel %vm531, %v679, 0
          %v686 = vsel %vm531, %v681, 0
          %688 = vmatprep.subr.bf16.mxu0 0
          %689 = vmatpush1.bf16.xpose.msra.mxu0 %v686
          %690 = vmatprep.subr.bf16.mxu0 0
          %691 = vmatpush1.bf16.xpose.msra.mxu0 0
          %692 = vmatprep.subr.bf16.mxu0 0
          %693 = vmatpush1.bf16.xpose.msra.mxu0 0
          %694 = vmatprep.subr.bf16.mxu0 0
          %695 = vmatpush1.bf16.xpose.msra.mxu0 0
          %696 = vmatprep.subr.bf16.mxu0 0
          %697 = vmatpush1.bf16.xpose.msra.mxu0 0
          %698 = vmatprep.subr.bf16.mxu0 0
          %699 = vmatpush1.bf16.xpose.msra.mxu0 0
          %700 = vmatprep.subr.bf16.mxu0 0
          %701 = vmatpush1.bf16.xpose.msra.mxu0 0
          %702 = vmatprep.subr.bf16.mxu0 0
          %703 = vmatpush1.bf16.xpose.msra.mxu0 0
          %704 = vmatprep.subr.bf16.mxu0 0
          %705 = vmatpush1.bf16.xpose.msra.mxu0 0
          %706 = vmatprep.subr.bf16.mxu0 0
          %707 = vmatpush1.bf16.xpose.msra.mxu0 0
          %708 = vmatprep.subr.bf16.mxu0 0
          %709 = vmatpush1.bf16.xpose.msra.mxu0 0
          %710 = vmatprep.subr.bf16.mxu0 0
          %711 = vmatpush1.bf16.xpose.msra.mxu0 0
          %712 = vmatprep.subr.bf16.mxu0 0
          %713 = vmatpush1.bf16.xpose.msra.mxu0 0
          %714 = vmatprep.subr.bf16.mxu0 0
          %715 = vmatpush1.bf16.xpose.msra.mxu0 0
          %716 = vmatprep.subr.bf16.mxu0 0
          %717 = vmatpush1.bf16.xpose.msra.mxu0 0
          %718 = vmatprep.subr.bf16.mxu0 0
          %719 = vmatpush1.bf16.xpose.msra.mxu0 0
          %720 = vmatprep.mubr.bf16.mxu0 0
          %721 = vmatmul.mubr.bf16.gmra.mrb[0].mxu0 %v683
          %v722 = vpop.f32.mrb[0].mxu0
          %v723 = vadd.f32 0.0, %v722
          %v724 = vpop.f32.mrb[0].mxu0
          %v725 = vpop.f32.mrb[0].mxu0
          %v726 = vpop.f32.mrb[0].mxu0
          %727 = vdwg.mxu0
          %v728 = vadd.f32 %v573, %v416
          %v729 = vadd.f32 %v623, %v417
          %v730 = vadd.f32 %v673, %v418
          %v731 = vadd.f32 %v723, %v419
          %v732 = vsel %vm531, %v728, -inf
          %733 = vmax.xlane.f32.xlu0 %v732
          %v734 = vpop.xlane.xlu0 %733
          %v735 = vsel %vm531, %v729, -inf
          %736 = vmax.xlane.f32.xlu0 %v735
          %v737 = vpop.xlane.xlu0 %736
          %v738 = vsel %vm531, %v730, -inf
          %739 = vmax.xlane.f32.xlu0 %v738
          %v740 = vpop.xlane.xlu0 %739
          %v741 = vsel %vm531, %v731, -inf
          %742 = vmax.xlane.f32.xlu0 %v741
          %v743 = vpop.xlane.xlu0 %742
          %v744 = vsub.f32 %v728, %v734
          %v745 = vsub.f32 %v729, %v737
          %v746 = vsub.f32 %v730, %v740
          %v747 = vsub.f32 %v731, %v743
          %v748 = vmul.f32 %v744, 1.442695
          %v749 = vpow.pop %v748
          %v750 = vmul.f32 %v745, 1.442695
          %v751 = vpow.pop %v750
          %v752 = vmul.f32 %v746, 1.442695
          %v753 = vpow.pop %v752
          %v754 = vmul.f32 %v747, 1.442695
          %v755 = vpow.pop %v754
          %v756 = vsel %vm531, %v749, 0.0
          %757 = vadd.xlane.f32.xlu0 %v756
          %v758 = vpop.xlane.xlu0 %757
          %v759 = vsel %vm531, %v751, 0.0
          %760 = vadd.xlane.f32.xlu0 %v759
          %v761 = vpop.xlane.xlu0 %760
          %v762 = vsel %vm531, %v753, 0.0
          %763 = vadd.xlane.f32.xlu0 %v762
          %v764 = vpop.xlane.xlu0 %763
          %v765 = vsel %vm531, %v755, 0.0
          %766 = vadd.xlane.f32.xlu0 %v765
          %v767 = vpop.xlane.xlu0 %766
          %v768 = vrcp.pop %v758
          %v769 = vrcp.pop %v761
          %v770 = vrcp.pop %v764
          %v771 = vrcp.pop %v767
          %v772 = vmul.f32 %v749, %v768
          %v773 = vmul.f32 %v751, %v769
          %v774 = vmul.f32 %v753, %v770
          %v775 = vmul.f32 %v755, %v771
          %v776 = vpack.c.bf16 %v773, %v772
          %v777 = vpack.c.bf16 %v775, %v774
          %778 = vrot.lane.b32.xlu0 %v527, 64
          %v779 = vpop.permute.xlu0 %778
          %v781 = vsel %vm531, %v776, 0
          %vm783 = vcmask 1043456
          %v785 = vsel %vm783, %v779, 0
          %787 = vmatprep.subr.bf16.mxu0 0
          %788 = vmatpush1.bf16.msra.mxu0 %v785
          %789 = vmatprep.subr.bf16.mxu0 0
          %790 = vmatpush1.bf16.msra.mxu0 0
          %791 = vmatprep.subr.bf16.mxu0 0
          %792 = vmatpush1.bf16.msra.mxu0 0
          %793 = vmatprep.subr.bf16.mxu0 0
          %794 = vmatpush1.bf16.msra.mxu0 0
          %795 = vmatprep.subr.bf16.mxu0 0
          %796 = vmatpush1.bf16.msra.mxu0 0
          %797 = vmatprep.subr.bf16.mxu0 0
          %798 = vmatpush1.bf16.msra.mxu0 0
          %799 = vmatprep.subr.bf16.mxu0 0
          %800 = vmatpush1.bf16.msra.mxu0 0
          %801 = vmatprep.subr.bf16.mxu0 0
          %802 = vmatpush1.bf16.msra.mxu0 0
          %803 = vmatprep.subr.bf16.mxu0 0
          %804 = vmatpush1.bf16.msra.mxu0 0
          %805 = vmatprep.subr.bf16.mxu0 0
          %806 = vmatpush1.bf16.msra.mxu0 0
          %807 = vmatprep.subr.bf16.mxu0 0
          %808 = vmatpush1.bf16.msra.mxu0 0
          %809 = vmatprep.subr.bf16.mxu0 0
          %810 = vmatpush1.bf16.msra.mxu0 0
          %811 = vmatprep.subr.bf16.mxu0 0
          %812 = vmatpush1.bf16.msra.mxu0 0
          %813 = vmatprep.subr.bf16.mxu0 0
          %814 = vmatpush1.bf16.msra.mxu0 0
          %815 = vmatprep.subr.bf16.mxu0 0
          %816 = vmatpush1.bf16.msra.mxu0 0
          %817 = vmatprep.subr.bf16.mxu0 0
          %818 = vmatpush1.bf16.msra.mxu0 0
          %819 = vmatprep.mubr.bf16.mxu0 0
          %820 = vmatmul.mubr.bf16.gmra.mrb[0].mxu0 %v781
          %v821 = vpop.f32.mrb[0].mxu0
          %v822 = vadd.f32 0.0, %v821
          %v823 = vpop.f32.mrb[0].mxu0
          %v824 = vpop.f32.mrb[0].mxu0
          %v825 = vpop.f32.mrb[0].mxu0
          %826 = vdwg.mxu0
          %v827 = vpack.c.bf16 %v822, %v822
          %v829 = vrot.slane %v776, 4
          %830 = vrot.lane.b32.xlu0 %v527, 56
          %v831 = vpop.permute.xlu0 %830
          %v833 = vsel %vm531, %v829, 0
          %v836 = vsel %vm783, %v831, 0
          %838 = vmatprep.subr.bf16.mxu0 0
          %839 = vmatpush1.bf16.msra.mxu0 %v836
          %840 = vmatprep.subr.bf16.mxu0 0
          %841 = vmatpush1.bf16.msra.mxu0 0
          %842 = vmatprep.subr.bf16.mxu0 0
          %843 = vmatpush1.bf16.msra.mxu0 0
          %844 = vmatprep.subr.bf16.mxu0 0
          %845 = vmatpush1.bf16.msra.mxu0 0
          %846 = vmatprep.subr.bf16.mxu0 0
          %847 = vmatpush1.bf16.msra.mxu0 0
          %848 = vmatprep.subr.bf16.mxu0 0
          %849 = vmatpush1.bf16.msra.mxu0 0
          %850 = vmatprep.subr.bf16.mxu0 0
          %851 = vmatpush1.bf16.msra.mxu0 0
          %852 = vmatprep.subr.bf16.mxu0 0
          %853 = vmatpush1.bf16.msra.mxu0 0
          %854 = vmatprep.subr.bf16.mxu0 0
          %855 = vmatpush1.bf16.msra.mxu0 0
          %856 = vmatprep.subr.bf16.mxu0 0
          %857 = vmatpush1.bf16.msra.mxu0 0
          %858 = vmatprep.subr.bf16.mxu0 0
          %859 = vmatpush1.bf16.msra.mxu0 0
          %860 = vmatprep.subr.bf16.mxu0 0
          %861 = vmatpush1.bf16.msra.mxu0 0
          %862 = vmatprep.subr.bf16.mxu0 0
          %863 = vmatpush1.bf16.msra.mxu0 0
          %864 = vmatprep.subr.bf16.mxu0 0
          %865 = vmatpush1.bf16.msra.mxu0 0
          %866 = vmatprep.subr.bf16.mxu0 0
          %867 = vmatpush1.bf16.msra.mxu0 0
          %868 = vmatprep.subr.bf16.mxu0 0
          %869 = vmatpush1.bf16.msra.mxu0 0
          %870 = vmatprep.mubr.bf16.mxu0 0
          %871 = vmatmul.mubr.bf16.gmra.mrb[0].mxu0 %v833
          %v872 = vpop.f32.mrb[0].mxu0
          %v873 = vadd.f32 0.0, %v872
          %v874 = vpop.f32.mrb[0].mxu0
          %v875 = vpop.f32.mrb[0].mxu0
          %v876 = vpop.f32.mrb[0].mxu0
          %877 = vdwg.mxu0
          %v878 = vpack.c.bf16 %v873, %v873
          %v880 = vsel %vm531, %v878, 0
          %v883 = vsel %vm783, %v439, 0
          %885 = vmatprep.subr.bf16.mxu0 0
          %886 = vmatpush1.bf16.msra.mxu0 %v883
          %887 = vmatprep.subr.bf16.mxu0 0
          %888 = vmatpush1.bf16.msra.mxu0 0
          %889 = vmatprep.subr.bf16.mxu0 0
          %890 = vmatpush1.bf16.msra.mxu0 0
          %891 = vmatprep.subr.bf16.mxu0 0
          %892 = vmatpush1.bf16.msra.mxu0 0
          %893 = vmatprep.subr.bf16.mxu0 0
          %894 = vmatpush1.bf16.msra.mxu0 0
          %895 = vmatprep.subr.bf16.mxu0 0
          %896 = vmatpush1.bf16.msra.mxu0 0
          %897 = vmatprep.subr.bf16.mxu0 0
          %898 = vmatpush1.bf16.msra.mxu0 0
          %899 = vmatprep.subr.bf16.mxu0 0
          %900 = vmatpush1.bf16.msra.mxu0 0
          %901 = vmatprep.subr.bf16.mxu0 0
          %902 = vmatpush1.bf16.msra.mxu0 0
          %903 = vmatprep.subr.bf16.mxu0 0
          %904 = vmatpush1.bf16.msra.mxu0 0
          %905 = vmatprep.subr.bf16.mxu0 0
          %906 = vmatpush1.bf16.msra.mxu0 0
          %907 = vmatprep.subr.bf16.mxu0 0
          %908 = vmatpush1.bf16.msra.mxu0 0
          %909 = vmatprep.subr.bf16.mxu0 0
          %910 = vmatpush1.bf16.msra.mxu0 0
          %911 = vmatprep.subr.bf16.mxu0 0
          %912 = vmatpush1.bf16.msra.mxu0 0
          %913 = vmatprep.subr.bf16.mxu0 0
          %914 = vmatpush1.bf16.msra.mxu0 0
          %915 = vmatprep.subr.bf16.mxu0 0
          %916 = vmatpush1.bf16.msra.mxu0 0
          %917 = vmatprep.mubr.bf16.mxu0 0
          %918 = vmatmul.mubr.bf16.gmra.mrb[0].mxu0 %v880
          %v919 = vpop.f32.mrb[0].mxu0
          %v920 = vadd.f32 0.0, %v919
          %v921 = vpop.f32.mrb[0].mxu0
          %v922 = vpop.f32.mrb[0].mxu0
          %v923 = vpop.f32.mrb[0].mxu0
          %924 = vdwg.mxu0
          %v926 = vsel %vm531, %v827, 0
          %v929 = vsel %vm783, %v438, 0
          %931 = vmatprep.subr.bf16.mxu0 0
          %932 = vmatpush1.bf16.msra.mxu0 %v929
          %933 = vmatprep.subr.bf16.mxu0 0
          %934 = vmatpush1.bf16.msra.mxu0 0
          %935 = vmatprep.subr.bf16.mxu0 0
          %936 = vmatpush1.bf16.msra.mxu0 0
          %937 = vmatprep.subr.bf16.mxu0 0
          %938 = vmatpush1.bf16.msra.mxu0 0
          %939 = vmatprep.subr.bf16.mxu0 0
          %940 = vmatpush1.bf16.msra.mxu0 0
          %941 = vmatprep.subr.bf16.mxu0 0
          %942 = vmatpush1.bf16.msra.mxu0 0
          %943 = vmatprep.subr.bf16.mxu0 0
          %944 = vmatpush1.bf16.msra.mxu0 0
          %945 = vmatprep.subr.bf16.mxu0 0
          %946 = vmatpush1.bf16.msra.mxu0 0
          %947 = vmatprep.subr.bf16.mxu0 0
          %948 = vmatpush1.bf16.msra.mxu0 0
          %949 = vmatprep.subr.bf16.mxu0 0
          %950 = vmatpush1.bf16.msra.mxu0 0
          %951 = vmatprep.subr.bf16.mxu0 0
          %952 = vmatpush1.bf16.msra.mxu0 0
          %953 = vmatprep.subr.bf16.mxu0 0
          %954 = vmatpush1.bf16.msra.mxu0 0
          %955 = vmatprep.subr.bf16.mxu0 0
          %956 = vmatpush1.bf16.msra.mxu0 0
          %957 = vmatprep.subr.bf16.mxu0 0
          %958 = vmatpush1.bf16.msra.mxu0 0
          %959 = vmatprep.subr.bf16.mxu0 0
          %960 = vmatpush1.bf16.msra.mxu0 0
          %961 = vmatprep.subr.bf16.mxu0 0
          %962 = vmatpush1.bf16.msra.mxu0 0
          %963 = vmatprep.mubr.bf16.mxu0 0
          %964 = vmatmul.mubr.bf16.gmra.mrb[0].mxu0 %v926
          %v965 = vpop.f32.mrb[0].mxu0
          %v966 = vadd.f32 %v920, %v965
          %v967 = vpop.f32.mrb[0].mxu0
          %v968 = vpop.f32.mrb[0].mxu0
          %v969 = vpop.f32.mrb[0].mxu0
          %970 = vdwg.mxu0
          %971 = vrot.lane.b32.xlu0 %v527, 48
          %v972 = vpop.permute.xlu0 %971
          %v974 = vsel %vm531, %v777, 0
          %v977 = vsel %vm783, %v972, 0
          %979 = vmatprep.subr.bf16.mxu0 0
          %980 = vmatpush1.bf16.msra.mxu0 %v977
          %981 = vmatprep.subr.bf16.mxu0 0
          %982 = vmatpush1.bf16.msra.mxu0 0
          %983 = vmatprep.subr.bf16.mxu0 0
          %984 = vmatpush1.bf16.msra.mxu0 0
          %985 = vmatprep.subr.bf16.mxu0 0
          %986 = vmatpush1.bf16.msra.mxu0 0
          %987 = vmatprep.subr.bf16.mxu0 0
          %988 = vmatpush1.bf16.msra.mxu0 0
          %989 = vmatprep.subr.bf16.mxu0 0
          %990 = vmatpush1.bf16.msra.mxu0 0
          %991 = vmatprep.subr.bf16.mxu0 0
          %992 = vmatpush1.bf16.msra.mxu0 0
          %993 = vmatprep.subr.bf16.mxu0 0
          %994 = vmatpush1.bf16.msra.mxu0 0
          %995 = vmatprep.subr.bf16.mxu0 0
          %996 = vmatpush1.bf16.msra.mxu0 0
          %997 = vmatprep.subr.bf16.mxu0 0
          %998 = vmatpush1.bf16.msra.mxu0 0
          %999 = vmatprep.subr.bf16.mxu0 0
          %1000 = vmatpush1.bf16.msra.mxu0 0
          %1001 = vmatprep.subr.bf16.mxu0 0
          %1002 = vmatpush1.bf16.msra.mxu0 0
          %1003 = vmatprep.subr.bf16.mxu0 0
          %1004 = vmatpush1.bf16.msra.mxu0 0
          %1005 = vmatprep.subr.bf16.mxu0 0
          %1006 = vmatpush1.bf16.msra.mxu0 0
          %1007 = vmatprep.subr.bf16.mxu0 0
          %1008 = vmatpush1.bf16.msra.mxu0 0
          %1009 = vmatprep.subr.bf16.mxu0 0
          %1010 = vmatpush1.bf16.msra.mxu0 0
          %1011 = vmatprep.mubr.bf16.mxu0 0
          %1012 = vmatmul.mubr.bf16.gmra.mrb[0].mxu0 %v974
          %v1013 = vpop.f32.mrb[0].mxu0
          %v1014 = vadd.f32 0.0, %v1013
          %v1015 = vpop.f32.mrb[0].mxu0
          %v1016 = vpop.f32.mrb[0].mxu0
          %v1017 = vpop.f32.mrb[0].mxu0
          %1018 = vdwg.mxu0
          %v1019 = vpack.c.bf16 %v1014, %v1014
          %v1021 = vsel %vm531, %v1019, 0
          %v1024 = vsel %vm783, %v440, 0
          %1026 = vmatprep.subr.bf16.mxu0 0
          %1027 = vmatpush1.bf16.msra.mxu0 %v1024
          %1028 = vmatprep.subr.bf16.mxu0 0
          %1029 = vmatpush1.bf16.msra.mxu0 0
          %1030 = vmatprep.subr.bf16.mxu0 0
          %1031 = vmatpush1.bf16.msra.mxu0 0
          %1032 = vmatprep.subr.bf16.mxu0 0
          %1033 = vmatpush1.bf16.msra.mxu0 0
          %1034 = vmatprep.subr.bf16.mxu0 0
          %1035 = vmatpush1.bf16.msra.mxu0 0
          %1036 = vmatprep.subr.bf16.mxu0 0
          %1037 = vmatpush1.bf16.msra.mxu0 0
          %1038 = vmatprep.subr.bf16.mxu0 0
          %1039 = vmatpush1.bf16.msra.mxu0 0
          %1040 = vmatprep.subr.bf16.mxu0 0
          %1041 = vmatpush1.bf16.msra.mxu0 0
          %1042 = vmatprep.subr.bf16.mxu0 0
          %1043 = vmatpush1.bf16.msra.mxu0 0
          %1044 = vmatprep.subr.bf16.mxu0 0
          %1045 = vmatpush1.bf16.msra.mxu0 0
          %1046 = vmatprep.subr.bf16.mxu0 0
          %1047 = vmatpush1.bf16.msra.mxu0 0
          %1048 = vmatprep.subr.bf16.mxu0 0
          %1049 = vmatpush1.bf16.msra.mxu0 0
          %1050 = vmatprep.subr.bf16.mxu0 0
          %1051 = vmatpush1.bf16.msra.mxu0 0
          %1052 = vmatprep.subr.bf16.mxu0 0
          %1053 = vmatpush1.bf16.msra.mxu0 0
          %1054 = vmatprep.subr.bf16.mxu0 0
          %1055 = vmatpush1.bf16.msra.mxu0 0
          %1056 = vmatprep.subr.bf16.mxu0 0
          %1057 = vmatpush1.bf16.msra.mxu0 0
          %1058 = vmatprep.mubr.bf16.mxu0 0
          %1059 = vmatmul.mubr.bf16.gmra.mrb[0].mxu0 %v1021
          %v1060 = vpop.f32.mrb[0].mxu0
          %v1061 = vadd.f32 0.0, %v1060
          %v1062 = vpop.f32.mrb[0].mxu0
          %v1063 = vpop.f32.mrb[0].mxu0
          %v1064 = vpop.f32.mrb[0].mxu0
          %1065 = vdwg.mxu0
          %v1066 = vadd.f32 %v966, %v1061
          %v1068 = vrot.slane %v777, 4
          %1069 = vrot.lane.b32.xlu0 %v527, 40
          %v1070 = vpop.permute.xlu0 %1069
          %v1072 = vsel %vm531, %v1068, 0
          %v1075 = vsel %vm783, %v1070, 0
          %1077 = vmatprep.subr.bf16.mxu0 0
          %1078 = vmatpush1.bf16.msra.mxu0 %v1075
          %1079 = vmatprep.subr.bf16.mxu0 0
          %1080 = vmatpush1.bf16.msra.mxu0 0
          %1081 = vmatprep.subr.bf16.mxu0 0
          %1082 = vmatpush1.bf16.msra.mxu0 0
          %1083 = vmatprep.subr.bf16.mxu0 0
          %1084 = vmatpush1.bf16.msra.mxu0 0
          %1085 = vmatprep.subr.bf16.mxu0 0
          %1086 = vmatpush1.bf16.msra.mxu0 0
          %1087 = vmatprep.subr.bf16.mxu0 0
          %1088 = vmatpush1.bf16.msra.mxu0 0
          %1089 = vmatprep.subr.bf16.mxu0 0
          %1090 = vmatpush1.bf16.msra.mxu0 0
          %1091 = vmatprep.subr.bf16.mxu0 0
          %1092 = vmatpush1.bf16.msra.mxu0 0
          %1093 = vmatprep.subr.bf16.mxu0 0
          %1094 = vmatpush1.bf16.msra.mxu0 0
          %1095 = vmatprep.subr.bf16.mxu0 0
          %1096 = vmatpush1.bf16.msra.mxu0 0
          %1097 = vmatprep.subr.bf16.mxu0 0
          %1098 = vmatpush1.bf16.msra.mxu0 0
          %1099 = vmatprep.subr.bf16.mxu0 0
          %1100 = vmatpush1.bf16.msra.mxu0 0
          %1101 = vmatprep.subr.bf16.mxu0 0
          %1102 = vmatpush1.bf16.msra.mxu0 0
          %1103 = vmatprep.subr.bf16.mxu0 0
          %1104 = vmatpush1.bf16.msra.mxu0 0
          %1105 = vmatprep.subr.bf16.mxu0 0
          %1106 = vmatpush1.bf16.msra.mxu0 0
          %1107 = vmatprep.subr.bf16.mxu0 0
          %1108 = vmatpush1.bf16.msra.mxu0 0
          %1109 = vmatprep.mubr.bf16.mxu0 0
          %1110 = vmatmul.mubr.bf16.gmra.mrb[0].mxu0 %v1072
          %v1111 = vpop.f32.mrb[0].mxu0
          %v1112 = vadd.f32 0.0, %v1111
          %v1113 = vpop.f32.mrb[0].mxu0
          %v1114 = vpop.f32.mrb[0].mxu0
          %v1115 = vpop.f32.mrb[0].mxu0
          %1116 = vdwg.mxu0
          %v1117 = vpack.c.bf16 %v1112, %v1112
          %v1119 = vsel %vm531, %v1117, 0
          %v1122 = vsel %vm783, %v441, 0
          %1124 = vmatprep.subr.bf16.mxu0 0
          %1125 = vmatpush1.bf16.msra.mxu0 %v1122
          %1126 = vmatprep.subr.bf16.mxu0 0
          %1127 = vmatpush1.bf16.msra.mxu0 0
          %1128 = vmatprep.subr.bf16.mxu0 0
          %1129 = vmatpush1.bf16.msra.mxu0 0
          %1130 = vmatprep.subr.bf16.mxu0 0
          %1131 = vmatpush1.bf16.msra.mxu0 0
          %1132 = vmatprep.subr.bf16.mxu0 0
          %1133 = vmatpush1.bf16.msra.mxu0 0
          %1134 = vmatprep.subr.bf16.mxu0 0
          %1135 = vmatpush1.bf16.msra.mxu0 0
          %1136 = vmatprep.subr.bf16.mxu0 0
          %1137 = vmatpush1.bf16.msra.mxu0 0
          %1138 = vmatprep.subr.bf16.mxu0 0
          %1139 = vmatpush1.bf16.msra.mxu0 0
          %1140 = vmatprep.subr.bf16.mxu0 0
          %1141 = vmatpush1.bf16.msra.mxu0 0
          %1142 = vmatprep.subr.bf16.mxu0 0
          %1143 = vmatpush1.bf16.msra.mxu0 0
          %1144 = vmatprep.subr.bf16.mxu0 0
          %1145 = vmatpush1.bf16.msra.mxu0 0
          %1146 = vmatprep.subr.bf16.mxu0 0
          %1147 = vmatpush1.bf16.msra.mxu0 0
          %1148 = vmatprep.subr.bf16.mxu0 0
          %1149 = vmatpush1.bf16.msra.mxu0 0
          %1150 = vmatprep.subr.bf16.mxu0 0
          %1151 = vmatpush1.bf16.msra.mxu0 0
          %1152 = vmatprep.subr.bf16.mxu0 0
          %1153 = vmatpush1.bf16.msra.mxu0 0
          %1154 = vmatprep.subr.bf16.mxu0 0
          %1155 = vmatpush1.bf16.msra.mxu0 0
          %1156 = vmatprep.mubr.bf16.mxu0 0
          %1157 = vmatmul.mubr.bf16.gmra.mrb[0].mxu0 %v1119
          %v1158 = vpop.f32.mrb[0].mxu0
          %v1159 = vadd.f32 0.0, %v1158
          %v1160 = vpop.f32.mrb[0].mxu0
          %v1161 = vpop.f32.mrb[0].mxu0
          %v1162 = vpop.f32.mrb[0].mxu0
          %1163 = vdwg.mxu0
          %v1164 = vadd.f32 %v1066, %v1159
          %v1165 = vadd.f32 %v427, %v1164
          %v1166 = vmul.f32 %v1165, %v1165
          %v1167 = vsel %vm457, %v1166, 0.0
          %1168 = vadd.xlane.f32.xlu0 %v1167
          %v1169 = vpop.xlane.xlu0 %1168
          %v1170 = vmul.f32 %v1169, %v461
          %v1171 = vadd.f32 %v1170, 1e-06
          %v1172 = vrsqrt.pop %v1171
          %v1173 = vmul.f32 %v1165, %v1172
          %v1174 = vlaneseq
          %v1175 = vshrl.u32 %v1174, 7
          %v1176 = vsub.s32 1, %v1175
          %v1177 = vrot.slane %v455, %v1176
          %v1178 = vmul.f32 %v1173, %v1177
          %v1179 = vpack.c.bf16 %v1178, %v1178
          %1180 = vrot.lane.b32.xlu0 %v480, 32
          %v1181 = vpop.permute.xlu0 %1180
          %1182 = vrot.lane.b32.xlu0 %v481, 32
          %v1183 = vpop.permute.xlu0 %1182
          %v1187 = vsel %vm457, %v1179, 0
          %1189 = vmatprep.subr.bf16.mxu0 0
          %1190 = vmatpush1.bf16.msra.mxu0 %v1181
          %1191 = vmatprep.subr.bf16.mxu0 0
          %1192 = vmatpush1.bf16.msra.mxu0 %v1183
          %1193 = vmatprep.subr.bf16.mxu0 0
          %1194 = vmatpush1.bf16.msra.mxu0 0
          %1195 = vmatprep.subr.bf16.mxu0 0
          %1196 = vmatpush1.bf16.msra.mxu0 0
          %1197 = vmatprep.subr.bf16.mxu0 0
          %1198 = vmatpush1.bf16.msra.mxu0 0
          %1199 = vmatprep.subr.bf16.mxu0 0
          %1200 = vmatpush1.bf16.msra.mxu0 0
          %1201 = vmatprep.subr.bf16.mxu0 0
          %1202 = vmatpush1.bf16.msra.mxu0 0
          %1203 = vmatprep.subr.bf16.mxu0 0
          %1204 = vmatpush1.bf16.msra.mxu0 0
          %1205 = vmatprep.subr.bf16.mxu0 0
          %1206 = vmatpush1.bf16.msra.mxu0 0
          %1207 = vmatprep.subr.bf16.mxu0 0
          %1208 = vmatpush1.bf16.msra.mxu0 0
          %1209 = vmatprep.subr.bf16.mxu0 0
          %1210 = vmatpush1.bf16.msra.mxu0 0
          %1211 = vmatprep.subr.bf16.mxu0 0
          %1212 = vmatpush1.bf16.msra.mxu0 0
          %1213 = vmatprep.subr.bf16.mxu0 0
          %1214 = vmatpush1.bf16.msra.mxu0 0
          %1215 = vmatprep.subr.bf16.mxu0 0
          %1216 = vmatpush1.bf16.msra.mxu0 0
          %1217 = vmatprep.subr.bf16.mxu0 0
          %1218 = vmatpush1.bf16.msra.mxu0 0
          %1219 = vmatprep.subr.bf16.mxu0 0
          %1220 = vmatpush1.bf16.msra.mxu0 0
          %1221 = vmatprep.mubr.bf16.mxu0 0
          %1222 = vmatmul.mubr.bf16.gmra.mrb[0].mxu0 %v1187
          %v1223 = vpop.f32.mrb[0].mxu0
          %v1224 = vadd.f32 0.0, %v1223
          %v1225 = vpop.f32.mrb[0].mxu0
          %v1226 = vpop.f32.mrb[0].mxu0
          %v1227 = vpop.f32.mrb[0].mxu0
          %1228 = vdwg.mxu0
          %v1229 = vpack.c.bf16 %v1224, %v1224
          %v1230 = vunpack.c.h.b16 %v431
          %v1231 = vunpack.c.h.b16 %v432
          %v1232 = vunpack.c.h.b16 %v433
          %v1233 = vunpack.c.h.b16 %v434
          %v1234 = vpack.c.b16 %v1231, %v1230
          %v1235 = vpack.c.b16 %v1233, %v1232
          %v1239 = vsel %vm457, %v415, 0
          %1241 = vmatprep.subr.bf16.mxu0 0
          %1242 = vmatpush1.bf16.msra.mxu0 %v1234
          %1243 = vmatprep.subr.bf16.mxu0 0
          %1244 = vmatpush1.bf16.msra.mxu0 %v1235
          %1245 = vmatprep.subr.bf16.mxu0 0
          %1246 = vmatpush1.bf16.msra.mxu0 0
          %1247 = vmatprep.subr.bf16.mxu0 0
          %1248 = vmatpush1.bf16.msra.mxu0 0
          %1249 = vmatprep.subr.bf16.mxu0 0
          %1250 = vmatpush1.bf16.msra.mxu0 0
          %1251 = vmatprep.subr.bf16.mxu0 0
          %1252 = vmatpush1.bf16.msra.mxu0 0
          %1253 = vmatprep.subr.bf16.mxu0 0
          %1254 = vmatpush1.bf16.msra.mxu0 0
          %1255 = vmatprep.subr.bf16.mxu0 0
          %1256 = vmatpush1.bf16.msra.mxu0 0
          %1257 = vmatprep.subr.bf16.mxu0 0
          %1258 = vmatpush1.bf16.msra.mxu0 0
          %1259 = vmatprep.subr.bf16.mxu0 0
          %1260 = vmatpush1.bf16.msra.mxu0 0
          %1261 = vmatprep.subr.bf16.mxu0 0
          %1262 = vmatpush1.bf16.msra.mxu0 0
          %1263 = vmatprep.subr.bf16.mxu0 0
          %1264 = vmatpush1.bf16.msra.mxu0 0
          %1265 = vmatprep.subr.bf16.mxu0 0
          %1266 = vmatpush1.bf16.msra.mxu0 0
          %1267 = vmatprep.subr.bf16.mxu0 0
          %1268 = vmatpush1.bf16.msra.mxu0 0
          %1269 = vmatprep.subr.bf16.mxu0 0
          %1270 = vmatpush1.bf16.msra.mxu0 0
          %1271 = vmatprep.subr.bf16.mxu0 0
          %1272 = vmatpush1.bf16.msra.mxu0 0
          %1273 = vmatprep.mubr.bf16.mxu0 0
          %1274 = vmatmul.mubr.bf16.gmra.mrb[0].mxu0 %v1239
          %v1275 = vpop.f32.mrb[0].mxu0
          %v1276 = vadd.f32 0.0, %v1275
          %v1277 = vpop.f32.mrb[0].mxu0
          %v1278 = vpop.f32.mrb[0].mxu0
          %v1279 = vpop.f32.mrb[0].mxu0
          %1280 = vdwg.mxu0
          %v1281 = vpack.c.bf16 %v1276, %v1276
          %v1283 = vsel %vm531, %v1229, 0
          %v1286 = vsel %vm531, %v1281, 0
          %1288 = vmatprep.subr.bf16.mxu0 0
          %1289 = vmatpush1.bf16.xpose.msra.mxu0 %v1286
          %1290 = vmatprep.subr.bf16.mxu0 0
          %1291 = vmatpush1.bf16.xpose.msra.mxu0 0
          %1292 = vmatprep.subr.bf16.mxu0 0
          %1293 = vmatpush1.bf16.xpose.msra.mxu0 0
          %1294 = vmatprep.subr.bf16.mxu0 0
          %1295 = vmatpush1.bf16.xpose.msra.mxu0 0
          %1296 = vmatprep.subr.bf16.mxu0 0
          %1297 = vmatpush1.bf16.xpose.msra.mxu0 0
          %1298 = vmatprep.subr.bf16.mxu0 0
          %1299 = vmatpush1.bf16.xpose.msra.mxu0 0
          %1300 = vmatprep.subr.bf16.mxu0 0
          %1301 = vmatpush1.bf16.xpose.msra.mxu0 0
          %1302 = vmatprep.subr.bf16.mxu0 0
          %1303 = vmatpush1.bf16.xpose.msra.mxu0 0
          %1304 = vmatprep.subr.bf16.mxu0 0
          %1305 = vmatpush1.bf16.xpose.msra.mxu0 0
          %1306 = vmatprep.subr.bf16.mxu0 0
          %1307 = vmatpush1.bf16.xpose.msra.mxu0 0
          %1308 = vmatprep.subr.bf16.mxu0 0
          %1309 = vmatpush1.bf16.xpose.msra.mxu0 0
          %1310 = vmatprep.subr.bf16.mxu0 0
          %1311 = vmatpush1.bf16.xpose.msra.mxu0 0
          %1312 = vmatprep.subr.bf16.mxu0 0
          %1313 = vmatpush1.bf16.xpose.msra.mxu0 0
          %1314 = vmatprep.subr.bf16.mxu0 0
          %1315 = vmatpush1.bf16.xpose.msra.mxu0 0
          %1316 = vmatprep.subr.bf16.mxu0 0
          %1317 = vmatpush1.bf16.xpose.msra.mxu0 0
          %1318 = vmatprep.subr.bf16.mxu0 0
          %1319 = vmatpush1.bf16.xpose.msra.mxu0 0
          %1320 = vmatprep.mubr.bf16.mxu0 0
          %1321 = vmatmul.mubr.bf16.gmra.mrb[0].mxu0 %v1283
          %v1322 = vpop.f32.mrb[0].mxu0
          %v1323 = vadd.f32 0.0, %v1322
          %v1324 = vpop.f32.mrb[0].mxu0
          %v1325 = vpop.f32.mrb[0].mxu0
          %v1326 = vpop.f32.mrb[0].mxu0
          %1327 = vdwg.mxu0
          %1329 = vrot.lane.b32.xlu0 %v1229, 120
          %v1330 = vpop.permute.xlu0 %1329
          %1332 = vrot.lane.b32.xlu0 %v1281, 120
          %v1333 = vpop.permute.xlu0 %1332
          %v1335 = vsel %vm531, %v1330, 0
          %v1338 = vsel %vm531, %v1333, 0
          %1340 = vmatprep.subr.bf16.mxu0 0
          %1341 = vmatpush1.bf16.xpose.msra.mxu0 %v1338
          %1342 = vmatprep.subr.bf16.mxu0 0
          %1343 = vmatpush1.bf16.xpose.msra.mxu0 0
          %1344 = vmatprep.subr.bf16.mxu0 0
          %1345 = vmatpush1.bf16.xpose.msra.mxu0 0
          %1346 = vmatprep.subr.bf16.mxu0 0
          %1347 = vmatpush1.bf16.xpose.msra.mxu0 0
          %1348 = vmatprep.subr.bf16.mxu0 0
          %1349 = vmatpush1.bf16.xpose.msra.mxu0 0
          %1350 = vmatprep.subr.bf16.mxu0 0
          %1351 = vmatpush1.bf16.xpose.msra.mxu0 0
          %1352 = vmatprep.subr.bf16.mxu0 0
          %1353 = vmatpush1.bf16.xpose.msra.mxu0 0
          %1354 = vmatprep.subr.bf16.mxu0 0
          %1355 = vmatpush1.bf16.xpose.msra.mxu0 0
          %1356 = vmatprep.subr.bf16.mxu0 0
          %1357 = vmatpush1.bf16.xpose.msra.mxu0 0
          %1358 = vmatprep.subr.bf16.mxu0 0
          %1359 = vmatpush1.bf16.xpose.msra.mxu0 0
          %1360 = vmatprep.subr.bf16.mxu0 0
          %1361 = vmatpush1.bf16.xpose.msra.mxu0 0
          %1362 = vmatprep.subr.bf16.mxu0 0
          %1363 = vmatpush1.bf16.xpose.msra.mxu0 0
          %1364 = vmatprep.subr.bf16.mxu0 0
          %1365 = vmatpush1.bf16.xpose.msra.mxu0 0
          %1366 = vmatprep.subr.bf16.mxu0 0
          %1367 = vmatpush1.bf16.xpose.msra.mxu0 0
          %1368 = vmatprep.subr.bf16.mxu0 0
          %1369 = vmatpush1.bf16.xpose.msra.mxu0 0
          %1370 = vmatprep.subr.bf16.mxu0 0
          %1371 = vmatpush1.bf16.xpose.msra.mxu0 0
          %1372 = vmatprep.mubr.bf16.mxu0 0
          %1373 = vmatmul.mubr.bf16.gmra.mrb[0].mxu0 %v1335
          %v1374 = vpop.f32.mrb[0].mxu0
          %v1375 = vadd.f32 0.0, %v1374
          %v1376 = vpop.f32.mrb[0].mxu0
          %v1377 = vpop.f32.mrb[0].mxu0
          %v1378 = vpop.f32.mrb[0].mxu0
          %1379 = vdwg.mxu0
          %1380 = vrot.lane.b32.xlu0 %v1229, 112
          %v1381 = vpop.permute.xlu0 %1380
          %1382 = vrot.lane.b32.xlu0 %v1281, 112
          %v1383 = vpop.permute.xlu0 %1382
          %v1385 = vsel %vm531, %v1381, 0
          %v1388 = vsel %vm531, %v1383, 0
          %1390 = vmatprep.subr.bf16.mxu0 0
          %1391 = vmatpush1.bf16.xpose.msra.mxu0 %v1388
          %1392 = vmatprep.subr.bf16.mxu0 0
          %1393 = vmatpush1.bf16.xpose.msra.mxu0 0
          %1394 = vmatprep.subr.bf16.mxu0 0
          %1395 = vmatpush1.bf16.xpose.msra.mxu0 0
          %1396 = vmatprep.subr.bf16.mxu0 0
          %1397 = vmatpush1.bf16.xpose.msra.mxu0 0
          %1398 = vmatprep.subr.bf16.mxu0 0
          %1399 = vmatpush1.bf16.xpose.msra.mxu0 0
          %1400 = vmatprep.subr.bf16.mxu0 0
          %1401 = vmatpush1.bf16.xpose.msra.mxu0 0
          %1402 = vmatprep.subr.bf16.mxu0 0
          %1403 = vmatpush1.bf16.xpose.msra.mxu0 0
          %1404 = vmatprep.subr.bf16.mxu0 0
          %1405 = vmatpush1.bf16.xpose.msra.mxu0 0
          %1406 = vmatprep.subr.bf16.mxu0 0
          %1407 = vmatpush1.bf16.xpose.msra.mxu0 0
          %1408 = vmatprep.subr.bf16.mxu0 0
          %1409 = vmatpush1.bf16.xpose.msra.mxu0 0
          %1410 = vmatprep.subr.bf16.mxu0 0
          %1411 = vmatpush1.bf16.xpose.msra.mxu0 0
          %1412 = vmatprep.subr.bf16.mxu0 0
          %1413 = vmatpush1.bf16.xpose.msra.mxu0 0
          %1414 = vmatprep.subr.bf16.mxu0 0
          %1415 = vmatpush1.bf16.xpose.msra.mxu0 0
          %1416 = vmatprep.subr.bf16.mxu0 0
          %1417 = vmatpush1.bf16.xpose.msra.mxu0 0
          %1418 = vmatprep.subr.bf16.mxu0 0
          %1419 = vmatpush1.bf16.xpose.msra.mxu0 0
          %1420 = vmatprep.subr.bf16.mxu0 0
          %1421 = vmatpush1.bf16.xpose.msra.mxu0 0
          %1422 = vmatprep.mubr.bf16.mxu0 0
          %1423 = vmatmul.mubr.bf16.gmra.mrb[0].mxu0 %v1385
          %v1424 = vpop.f32.mrb[0].mxu0
          %v1425 = vadd.f32 0.0, %v1424
          %v1426 = vpop.f32.mrb[0].mxu0
          %v1427 = vpop.f32.mrb[0].mxu0
          %v1428 = vpop.f32.mrb[0].mxu0
          %1429 = vdwg.mxu0
          %1430 = vrot.lane.b32.xlu0 %v1229, 104
          %v1431 = vpop.permute.xlu0 %1430
          %1432 = vrot.lane.b32.xlu0 %v1281, 104
          %v1433 = vpop.permute.xlu0 %1432
          %v1435 = vsel %vm531, %v1431, 0
          %v1438 = vsel %vm531, %v1433, 0
          %1440 = vmatprep.subr.bf16.mxu0 0
          %1441 = vmatpush1.bf16.xpose.msra.mxu0 %v1438
          %1442 = vmatprep.subr.bf16.mxu0 0
          %1443 = vmatpush1.bf16.xpose.msra.mxu0 0
          %1444 = vmatprep.subr.bf16.mxu0 0
          %1445 = vmatpush1.bf16.xpose.msra.mxu0 0
          %1446 = vmatprep.subr.bf16.mxu0 0
          %1447 = vmatpush1.bf16.xpose.msra.mxu0 0
          %1448 = vmatprep.subr.bf16.mxu0 0
          %1449 = vmatpush1.bf16.xpose.msra.mxu0 0
          %1450 = vmatprep.subr.bf16.mxu0 0
          %1451 = vmatpush1.bf16.xpose.msra.mxu0 0
          %1452 = vmatprep.subr.bf16.mxu0 0
          %1453 = vmatpush1.bf16.xpose.msra.mxu0 0
          %1454 = vmatprep.subr.bf16.mxu0 0
          %1455 = vmatpush1.bf16.xpose.msra.mxu0 0
          %1456 = vmatprep.subr.bf16.mxu0 0
          %1457 = vmatpush1.bf16.xpose.msra.mxu0 0
          %1458 = vmatprep.subr.bf16.mxu0 0
          %1459 = vmatpush1.bf16.xpose.msra.mxu0 0
          %1460 = vmatprep.subr.bf16.mxu0 0
          %1461 = vmatpush1.bf16.xpose.msra.mxu0 0
          %1462 = vmatprep.subr.bf16.mxu0 0
          %1463 = vmatpush1.bf16.xpose.msra.mxu0 0
          %1464 = vmatprep.subr.bf16.mxu0 0
          %1465 = vmatpush1.bf16.xpose.msra.mxu0 0
          %1466 = vmatprep.subr.bf16.mxu0 0
          %1467 = vmatpush1.bf16.xpose.msra.mxu0 0
          %1468 = vmatprep.subr.bf16.mxu0 0
          %1469 = vmatpush1.bf16.xpose.msra.mxu0 0
          %1470 = vmatprep.subr.bf16.mxu0 0
          %1471 = vmatpush1.bf16.xpose.msra.mxu0 0
          %1472 = vmatprep.mubr.bf16.mxu0 0
          %1473 = vmatmul.mubr.bf16.gmra.mrb[0].mxu0 %v1435
          %v1474 = vpop.f32.mrb[0].mxu0
          %v1475 = vadd.f32 0.0, %v1474
          %v1476 = vpop.f32.mrb[0].mxu0
          %v1477 = vpop.f32.mrb[0].mxu0
          %v1478 = vpop.f32.mrb[0].mxu0
          %1479 = vdwg.mxu0
          %v1481 = vlaneseq
          %v1482 = vshrl.u32 %v1481, 7
          %v1483 = vsub.s32 0, %v1482
          %v1484 = vrot.slane %v420, %v1483
          %v1486 = vadd.f32 %v1323, %v1484
          %v1487 = vadd.f32 %v1375, %v1484
          %v1488 = vadd.f32 %v1425, %v1484
          %v1489 = vadd.f32 %v1475, %v1484
          %v1490 = vsel %vm531, %v1486, -inf
          %1491 = vmax.xlane.f32.xlu0 %v1490
          %v1492 = vpop.xlane.xlu0 %1491
          %v1493 = vsel %vm531, %v1487, -inf
          %1494 = vmax.xlane.f32.xlu0 %v1493
          %v1495 = vpop.xlane.xlu0 %1494
          %v1496 = vsel %vm531, %v1488, -inf
          %1497 = vmax.xlane.f32.xlu0 %v1496
          %v1498 = vpop.xlane.xlu0 %1497
          %v1499 = vsel %vm531, %v1489, -inf
          %1500 = vmax.xlane.f32.xlu0 %v1499
          %v1501 = vpop.xlane.xlu0 %1500
          %v1502 = vsub.f32 %v1486, %v1492
          %v1503 = vsub.f32 %v1487, %v1495
          %v1504 = vsub.f32 %v1488, %v1498
          %v1505 = vsub.f32 %v1489, %v1501
          %v1506 = vmul.f32 %v1502, 1.442695
          %v1507 = vpow.pop %v1506
          %v1508 = vmul.f32 %v1503, 1.442695
          %v1509 = vpow.pop %v1508
          %v1510 = vmul.f32 %v1504, 1.442695
          %v1511 = vpow.pop %v1510
          %v1512 = vmul.f32 %v1505, 1.442695
          %v1513 = vpow.pop %v1512
          %v1514 = vsel %vm531, %v1507, 0.0
          %1515 = vadd.xlane.f32.xlu0 %v1514
          %v1516 = vpop.xlane.xlu0 %1515
          %v1517 = vsel %vm531, %v1509, 0.0
          %1518 = vadd.xlane.f32.xlu0 %v1517
          %v1519 = vpop.xlane.xlu0 %1518
          %v1520 = vsel %vm531, %v1511, 0.0
          %1521 = vadd.xlane.f32.xlu0 %v1520
          %v1522 = vpop.xlane.xlu0 %1521
          %v1523 = vsel %vm531, %v1513, 0.0
          %1524 = vadd.xlane.f32.xlu0 %v1523
          %v1525 = vpop.xlane.xlu0 %1524
          %v1526 = vrcp.pop %v1516
          %v1527 = vrcp.pop %v1519
          %v1528 = vrcp.pop %v1522
          %v1529 = vrcp.pop %v1525
          %v1530 = vmul.f32 %v1507, %v1526
          %v1531 = vmul.f32 %v1509, %v1527
          %v1532 = vmul.f32 %v1511, %v1528
          %v1533 = vmul.f32 %v1513, %v1529
          %v1534 = vpack.c.bf16 %v1531, %v1530
          %v1535 = vpack.c.bf16 %v1533, %v1532
          %1536 = vrot.lane.b32.xlu0 %v1281, 96
          %v1537 = vpop.permute.xlu0 %1536
          %v1539 = vsel %vm531, %v1534, 0
          %v1542 = vsel %vm783, %v1537, 0
          %1544 = vmatprep.subr.bf16.mxu0 0
          %1545 = vmatpush1.bf16.msra.mxu0 %v1542
          %1546 = vmatprep.subr.bf16.mxu0 0
          %1547 = vmatpush1.bf16.msra.mxu0 0
          %1548 = vmatprep.subr.bf16.mxu0 0
          %1549 = vmatpush1.bf16.msra.mxu0 0
          %1550 = vmatprep.subr.bf16.mxu0 0
          %1551 = vmatpush1.bf16.msra.mxu0 0
          %1552 = vmatprep.subr.bf16.mxu0 0
          %1553 = vmatpush1.bf16.msra.mxu0 0
          %1554 = vmatprep.subr.bf16.mxu0 0
          %1555 = vmatpush1.bf16.msra.mxu0 0
          %1556 = vmatprep.subr.bf16.mxu0 0
          %1557 = vmatpush1.bf16.msra.mxu0 0
          %1558 = vmatprep.subr.bf16.mxu0 0
          %1559 = vmatpush1.bf16.msra.mxu0 0
          %1560 = vmatprep.subr.bf16.mxu0 0
          %1561 = vmatpush1.bf16.msra.mxu0 0
          %1562 = vmatprep.subr.bf16.mxu0 0
          %1563 = vmatpush1.bf16.msra.mxu0 0
          %1564 = vmatprep.subr.bf16.mxu0 0
          %1565 = vmatpush1.bf16.msra.mxu0 0
          %1566 = vmatprep.subr.bf16.mxu0 0
          %1567 = vmatpush1.bf16.msra.mxu0 0
          %1568 = vmatprep.subr.bf16.mxu0 0
          %1569 = vmatpush1.bf16.msra.mxu0 0
          %1570 = vmatprep.subr.bf16.mxu0 0
          %1571 = vmatpush1.bf16.msra.mxu0 0
          %1572 = vmatprep.subr.bf16.mxu0 0
          %1573 = vmatpush1.bf16.msra.mxu0 0
          %1574 = vmatprep.subr.bf16.mxu0 0
          %1575 = vmatpush1.bf16.msra.mxu0 0
          %1576 = vmatprep.mubr.bf16.mxu0 0
          %1577 = vmatmul.mubr.bf16.gmra.mrb[0].mxu0 %v1539
          %v1578 = vpop.f32.mrb[0].mxu0
          %v1579 = vadd.f32 0.0, %v1578
          %v1580 = vpop.f32.mrb[0].mxu0
          %v1581 = vpop.f32.mrb[0].mxu0
          %v1582 = vpop.f32.mrb[0].mxu0
          %1583 = vdwg.mxu0
          %v1584 = vpack.c.bf16 %v1579, %v1579
          %v1586 = vrot.slane %v1534, 4
          %1587 = vrot.lane.b32.xlu0 %v1281, 88
          %v1588 = vpop.permute.xlu0 %1587
          %v1590 = vsel %vm531, %v1586, 0
          %v1593 = vsel %vm783, %v1588, 0
          %1595 = vmatprep.subr.bf16.mxu0 0
          %1596 = vmatpush1.bf16.msra.mxu0 %v1593
          %1597 = vmatprep.subr.bf16.mxu0 0
          %1598 = vmatpush1.bf16.msra.mxu0 0
          %1599 = vmatprep.subr.bf16.mxu0 0
          %1600 = vmatpush1.bf16.msra.mxu0 0
          %1601 = vmatprep.subr.bf16.mxu0 0
          %1602 = vmatpush1.bf16.msra.mxu0 0
          %1603 = vmatprep.subr.bf16.mxu0 0
          %1604 = vmatpush1.bf16.msra.mxu0 0
          %1605 = vmatprep.subr.bf16.mxu0 0
          %1606 = vmatpush1.bf16.msra.mxu0 0
          %1607 = vmatprep.subr.bf16.mxu0 0
          %1608 = vmatpush1.bf16.msra.mxu0 0
          %1609 = vmatprep.subr.bf16.mxu0 0
          %1610 = vmatpush1.bf16.msra.mxu0 0
          %1611 = vmatprep.subr.bf16.mxu0 0
          %1612 = vmatpush1.bf16.msra.mxu0 0
          %1613 = vmatprep.subr.bf16.mxu0 0
          %1614 = vmatpush1.bf16.msra.mxu0 0
          %1615 = vmatprep.subr.bf16.mxu0 0
          %1616 = vmatpush1.bf16.msra.mxu0 0
          %1617 = vmatprep.subr.bf16.mxu0 0
          %1618 = vmatpush1.bf16.msra.mxu0 0
          %1619 = vmatprep.subr.bf16.mxu0 0
          %1620 = vmatpush1.bf16.msra.mxu0 0
          %1621 = vmatprep.subr.bf16.mxu0 0
          %1622 = vmatpush1.bf16.msra.mxu0 0
          %1623 = vmatprep.subr.bf16.mxu0 0
          %1624 = vmatpush1.bf16.msra.mxu0 0
          %1625 = vmatprep.subr.bf16.mxu0 0
          %1626 = vmatpush1.bf16.msra.mxu0 0
          %1627 = vmatprep.mubr.bf16.mxu0 0
          %1628 = vmatmul.mubr.bf16.gmra.mrb[0].mxu0 %v1590
          %v1629 = vpop.f32.mrb[0].mxu0
          %v1630 = vadd.f32 0.0, %v1629
          %v1631 = vpop.f32.mrb[0].mxu0
          %v1632 = vpop.f32.mrb[0].mxu0
          %v1633 = vpop.f32.mrb[0].mxu0
          %1634 = vdwg.mxu0
          %v1635 = vpack.c.bf16 %v1630, %v1630
          %v1637 = vsel %vm531, %v1635, 0
          %v1640 = vsel %vm783, %v443, 0
          %1642 = vmatprep.subr.bf16.mxu0 0
          %1643 = vmatpush1.bf16.msra.mxu0 %v1640
          %1644 = vmatprep.subr.bf16.mxu0 0
          %1645 = vmatpush1.bf16.msra.mxu0 0
          %1646 = vmatprep.subr.bf16.mxu0 0
          %1647 = vmatpush1.bf16.msra.mxu0 0
          %1648 = vmatprep.subr.bf16.mxu0 0
          %1649 = vmatpush1.bf16.msra.mxu0 0
          %1650 = vmatprep.subr.bf16.mxu0 0
          %1651 = vmatpush1.bf16.msra.mxu0 0
          %1652 = vmatprep.subr.bf16.mxu0 0
          %1653 = vmatpush1.bf16.msra.mxu0 0
          %1654 = vmatprep.subr.bf16.mxu0 0
          %1655 = vmatpush1.bf16.msra.mxu0 0
          %1656 = vmatprep.subr.bf16.mxu0 0
          %1657 = vmatpush1.bf16.msra.mxu0 0
          %1658 = vmatprep.subr.bf16.mxu0 0
          %1659 = vmatpush1.bf16.msra.mxu0 0
          %1660 = vmatprep.subr.bf16.mxu0 0
          %1661 = vmatpush1.bf16.msra.mxu0 0
          %1662 = vmatprep.subr.bf16.mxu0 0
          %1663 = vmatpush1.bf16.msra.mxu0 0
          %1664 = vmatprep.subr.bf16.mxu0 0
          %1665 = vmatpush1.bf16.msra.mxu0 0
          %1666 = vmatprep.subr.bf16.mxu0 0
          %1667 = vmatpush1.bf16.msra.mxu0 0
          %1668 = vmatprep.subr.bf16.mxu0 0
          %1669 = vmatpush1.bf16.msra.mxu0 0
          %1670 = vmatprep.subr.bf16.mxu0 0
          %1671 = vmatpush1.bf16.msra.mxu0 0
          %1672 = vmatprep.subr.bf16.mxu0 0
          %1673 = vmatpush1.bf16.msra.mxu0 0
          %1674 = vmatprep.mubr.bf16.mxu0 0
          %1675 = vmatmul.mubr.bf16.gmra.mrb[0].mxu0 %v1637
          %v1676 = vpop.f32.mrb[0].mxu0
          %v1677 = vadd.f32 0.0, %v1676
          %v1678 = vpop.f32.mrb[0].mxu0
          %v1679 = vpop.f32.mrb[0].mxu0
          %v1680 = vpop.f32.mrb[0].mxu0
          %1681 = vdwg.mxu0
          %v1683 = vsel %vm531, %v1584, 0
          %v1686 = vsel %vm783, %v442, 0
          %1688 = vmatprep.subr.bf16.mxu0 0
          %1689 = vmatpush1.bf16.msra.mxu0 %v1686
          %1690 = vmatprep.subr.bf16.mxu0 0
          %1691 = vmatpush1.bf16.msra.mxu0 0
          %1692 = vmatprep.subr.bf16.mxu0 0
          %1693 = vmatpush1.bf16.msra.mxu0 0
          %1694 = vmatprep.subr.bf16.mxu0 0
          %1695 = vmatpush1.bf16.msra.mxu0 0
          %1696 = vmatprep.subr.bf16.mxu0 0
          %1697 = vmatpush1.bf16.msra.mxu0 0
          %1698 = vmatprep.subr.bf16.mxu0 0
          %1699 = vmatpush1.bf16.msra.mxu0 0
          %1700 = vmatprep.subr.bf16.mxu0 0
          %1701 = vmatpush1.bf16.msra.mxu0 0
          %1702 = vmatprep.subr.bf16.mxu0 0
          %1703 = vmatpush1.bf16.msra.mxu0 0
          %1704 = vmatprep.subr.bf16.mxu0 0
          %1705 = vmatpush1.bf16.msra.mxu0 0
          %1706 = vmatprep.subr.bf16.mxu0 0
          %1707 = vmatpush1.bf16.msra.mxu0 0
          %1708 = vmatprep.subr.bf16.mxu0 0
          %1709 = vmatpush1.bf16.msra.mxu0 0
          %1710 = vmatprep.subr.bf16.mxu0 0
          %1711 = vmatpush1.bf16.msra.mxu0 0
          %1712 = vmatprep.subr.bf16.mxu0 0
          %1713 = vmatpush1.bf16.msra.mxu0 0
          %1714 = vmatprep.subr.bf16.mxu0 0
          %1715 = vmatpush1.bf16.msra.mxu0 0
          %1716 = vmatprep.subr.bf16.mxu0 0
          %1717 = vmatpush1.bf16.msra.mxu0 0
          %1718 = vmatprep.subr.bf16.mxu0 0
          %1719 = vmatpush1.bf16.msra.mxu0 0
          %1720 = vmatprep.mubr.bf16.mxu0 0
          %1721 = vmatmul.mubr.bf16.gmra.mrb[0].mxu0 %v1683
          %v1722 = vpop.f32.mrb[0].mxu0
          %v1723 = vadd.f32 %v1677, %v1722
          %v1724 = vpop.f32.mrb[0].mxu0
          %v1725 = vpop.f32.mrb[0].mxu0
          %v1726 = vpop.f32.mrb[0].mxu0
          %1727 = vdwg.mxu0
          %1728 = vrot.lane.b32.xlu0 %v1281, 80
          %v1729 = vpop.permute.xlu0 %1728
          %v1731 = vsel %vm531, %v1535, 0
          %v1734 = vsel %vm783, %v1729, 0
          %1736 = vmatprep.subr.bf16.mxu0 0
          %1737 = vmatpush1.bf16.msra.mxu0 %v1734
          %1738 = vmatprep.subr.bf16.mxu0 0
          %1739 = vmatpush1.bf16.msra.mxu0 0
          %1740 = vmatprep.subr.bf16.mxu0 0
          %1741 = vmatpush1.bf16.msra.mxu0 0
          %1742 = vmatprep.subr.bf16.mxu0 0
          %1743 = vmatpush1.bf16.msra.mxu0 0
          %1744 = vmatprep.subr.bf16.mxu0 0
          %1745 = vmatpush1.bf16.msra.mxu0 0
          %1746 = vmatprep.subr.bf16.mxu0 0
          %1747 = vmatpush1.bf16.msra.mxu0 0
          %1748 = vmatprep.subr.bf16.mxu0 0
          %1749 = vmatpush1.bf16.msra.mxu0 0
          %1750 = vmatprep.subr.bf16.mxu0 0
          %1751 = vmatpush1.bf16.msra.mxu0 0
          %1752 = vmatprep.subr.bf16.mxu0 0
          %1753 = vmatpush1.bf16.msra.mxu0 0
          %1754 = vmatprep.subr.bf16.mxu0 0
          %1755 = vmatpush1.bf16.msra.mxu0 0
          %1756 = vmatprep.subr.bf16.mxu0 0
          %1757 = vmatpush1.bf16.msra.mxu0 0
          %1758 = vmatprep.subr.bf16.mxu0 0
          %1759 = vmatpush1.bf16.msra.mxu0 0
          %1760 = vmatprep.subr.bf16.mxu0 0
          %1761 = vmatpush1.bf16.msra.mxu0 0
          %1762 = vmatprep.subr.bf16.mxu0 0
          %1763 = vmatpush1.bf16.msra.mxu0 0
          %1764 = vmatprep.subr.bf16.mxu0 0
          %1765 = vmatpush1.bf16.msra.mxu0 0
          %1766 = vmatprep.subr.bf16.mxu0 0
          %1767 = vmatpush1.bf16.msra.mxu0 0
          %1768 = vmatprep.mubr.bf16.mxu0 0
          %1769 = vmatmul.mubr.bf16.gmra.mrb[0].mxu0 %v1731
          %v1770 = vpop.f32.mrb[0].mxu0
          %v1771 = vadd.f32 0.0, %v1770
          %v1772 = vpop.f32.mrb[0].mxu0
          %v1773 = vpop.f32.mrb[0].mxu0
          %v1774 = vpop.f32.mrb[0].mxu0
          %1775 = vdwg.mxu0
          %v1776 = vpack.c.bf16 %v1771, %v1771
          %v1778 = vsel %vm531, %v1776, 0
          %v1781 = vsel %vm783, %v444, 0
          %1783 = vmatprep.subr.bf16.mxu0 0
          %1784 = vmatpush1.bf16.msra.mxu0 %v1781
          %1785 = vmatprep.subr.bf16.mxu0 0
          %1786 = vmatpush1.bf16.msra.mxu0 0
          %1787 = vmatprep.subr.bf16.mxu0 0
          %1788 = vmatpush1.bf16.msra.mxu0 0
          %1789 = vmatprep.subr.bf16.mxu0 0
          %1790 = vmatpush1.bf16.msra.mxu0 0
          %1791 = vmatprep.subr.bf16.mxu0 0
          %1792 = vmatpush1.bf16.msra.mxu0 0
          %1793 = vmatprep.subr.bf16.mxu0 0
          %1794 = vmatpush1.bf16.msra.mxu0 0
          %1795 = vmatprep.subr.bf16.mxu0 0
          %1796 = vmatpush1.bf16.msra.mxu0 0
          %1797 = vmatprep.subr.bf16.mxu0 0
          %1798 = vmatpush1.bf16.msra.mxu0 0
          %1799 = vmatprep.subr.bf16.mxu0 0
          %1800 = vmatpush1.bf16.msra.mxu0 0
          %1801 = vmatprep.subr.bf16.mxu0 0
          %1802 = vmatpush1.bf16.msra.mxu0 0
          %1803 = vmatprep.subr.bf16.mxu0 0
          %1804 = vmatpush1.bf16.msra.mxu0 0
          %1805 = vmatprep.subr.bf16.mxu0 0
          %1806 = vmatpush1.bf16.msra.mxu0 0
          %1807 = vmatprep.subr.bf16.mxu0 0
          %1808 = vmatpush1.bf16.msra.mxu0 0
          %1809 = vmatprep.subr.bf16.mxu0 0
          %1810 = vmatpush1.bf16.msra.mxu0 0
          %1811 = vmatprep.subr.bf16.mxu0 0
          %1812 = vmatpush1.bf16.msra.mxu0 0
          %1813 = vmatprep.subr.bf16.mxu0 0
          %1814 = vmatpush1.bf16.msra.mxu0 0
          %1815 = vmatprep.mubr.bf16.mxu0 0
          %1816 = vmatmul.mubr.bf16.gmra.mrb[0].mxu0 %v1778
          %v1817 = vpop.f32.mrb[0].mxu0
          %v1818 = vadd.f32 0.0, %v1817
          %v1819 = vpop.f32.mrb[0].mxu0
          %v1820 = vpop.f32.mrb[0].mxu0
          %v1821 = vpop.f32.mrb[0].mxu0
          %1822 = vdwg.mxu0
          %v1823 = vadd.f32 %v1723, %v1818
          %v1825 = vrot.slane %v1535, 4
          %1826 = vrot.lane.b32.xlu0 %v1281, 72
          %v1827 = vpop.permute.xlu0 %1826
          %v1829 = vsel %vm531, %v1825, 0
          %v1832 = vsel %vm783, %v1827, 0
          %1834 = vmatprep.subr.bf16.mxu0 0
          %1835 = vmatpush1.bf16.msra.mxu0 %v1832
          %1836 = vmatprep.subr.bf16.mxu0 0
          %1837 = vmatpush1.bf16.msra.mxu0 0
          %1838 = vmatprep.subr.bf16.mxu0 0
          %1839 = vmatpush1.bf16.msra.mxu0 0
          %1840 = vmatprep.subr.bf16.mxu0 0
          %1841 = vmatpush1.bf16.msra.mxu0 0
          %1842 = vmatprep.subr.bf16.mxu0 0
          %1843 = vmatpush1.bf16.msra.mxu0 0
          %1844 = vmatprep.subr.bf16.mxu0 0
          %1845 = vmatpush1.bf16.msra.mxu0 0
          %1846 = vmatprep.subr.bf16.mxu0 0
          %1847 = vmatpush1.bf16.msra.mxu0 0
          %1848 = vmatprep.subr.bf16.mxu0 0
          %1849 = vmatpush1.bf16.msra.mxu0 0
          %1850 = vmatprep.subr.bf16.mxu0 0
          %1851 = vmatpush1.bf16.msra.mxu0 0
          %1852 = vmatprep.subr.bf16.mxu0 0
          %1853 = vmatpush1.bf16.msra.mxu0 0
          %1854 = vmatprep.subr.bf16.mxu0 0
          %1855 = vmatpush1.bf16.msra.mxu0 0
          %1856 = vmatprep.subr.bf16.mxu0 0
          %1857 = vmatpush1.bf16.msra.mxu0 0
          %1858 = vmatprep.subr.bf16.mxu0 0
          %1859 = vmatpush1.bf16.msra.mxu0 0
          %1860 = vmatprep.subr.bf16.mxu0 0
          %1861 = vmatpush1.bf16.msra.mxu0 0
          %1862 = vmatprep.subr.bf16.mxu0 0
          %1863 = vmatpush1.bf16.msra.mxu0 0
          %1864 = vmatprep.subr.bf16.mxu0 0
          %1865 = vmatpush1.bf16.msra.mxu0 0
          %1866 = vmatprep.mubr.bf16.mxu0 0
          %1867 = vmatmul.mubr.bf16.gmra.mrb[0].mxu0 %v1829
          %v1868 = vpop.f32.mrb[0].mxu0
          %v1869 = vadd.f32 0.0, %v1868
          %v1870 = vpop.f32.mrb[0].mxu0
          %v1871 = vpop.f32.mrb[0].mxu0
          %v1872 = vpop.f32.mrb[0].mxu0
          %1873 = vdwg.mxu0
          %v1874 = vpack.c.bf16 %v1869, %v1869
          %v1876 = vsel %vm531, %v1874, 0
          %v1879 = vsel %vm783, %v445, 0
          %1881 = vmatprep.subr.bf16.mxu0 0
          %1882 = vmatpush1.bf16.msra.mxu0 %v1879
          %1883 = vmatprep.subr.bf16.mxu0 0
          %1884 = vmatpush1.bf16.msra.mxu0 0
          %1885 = vmatprep.subr.bf16.mxu0 0
          %1886 = vmatpush1.bf16.msra.mxu0 0
          %1887 = vmatprep.subr.bf16.mxu0 0
          %1888 = vmatpush1.bf16.msra.mxu0 0
          %1889 = vmatprep.subr.bf16.mxu0 0
          %1890 = vmatpush1.bf16.msra.mxu0 0
          %1891 = vmatprep.subr.bf16.mxu0 0
          %1892 = vmatpush1.bf16.msra.mxu0 0
          %1893 = vmatprep.subr.bf16.mxu0 0
          %1894 = vmatpush1.bf16.msra.mxu0 0
          %1895 = vmatprep.subr.bf16.mxu0 0
          %1896 = vmatpush1.bf16.msra.mxu0 0
          %1897 = vmatprep.subr.bf16.mxu0 0
          %1898 = vmatpush1.bf16.msra.mxu0 0
          %1899 = vmatprep.subr.bf16.mxu0 0
          %1900 = vmatpush1.bf16.msra.mxu0 0
          %1901 = vmatprep.subr.bf16.mxu0 0
          %1902 = vmatpush1.bf16.msra.mxu0 0
          %1903 = vmatprep.subr.bf16.mxu0 0
          %1904 = vmatpush1.bf16.msra.mxu0 0
          %1905 = vmatprep.subr.bf16.mxu0 0
          %1906 = vmatpush1.bf16.msra.mxu0 0
          %1907 = vmatprep.subr.bf16.mxu0 0
          %1908 = vmatpush1.bf16.msra.mxu0 0
          %1909 = vmatprep.subr.bf16.mxu0 0
          %1910 = vmatpush1.bf16.msra.mxu0 0
          %1911 = vmatprep.subr.bf16.mxu0 0
          %1912 = vmatpush1.bf16.msra.mxu0 0
          %1913 = vmatprep.mubr.bf16.mxu0 0
          %1914 = vmatmul.mubr.bf16.gmra.mrb[0].mxu0 %v1876
          %v1915 = vpop.f32.mrb[0].mxu0
          %v1916 = vadd.f32 0.0, %v1915
          %v1917 = vpop.f32.mrb[0].mxu0
          %v1918 = vpop.f32.mrb[0].mxu0
          %v1919 = vpop.f32.mrb[0].mxu0
          %1920 = vdwg.mxu0
          %v1921 = vadd.f32 %v1823, %v1916
          %v1922 = vadd.f32 %v1165, %v1921
          %v1923 = vmul.f32 %v1922, %v1922
          %v1924 = vsel %vm457, %v1923, 0.0
          %1925 = vadd.xlane.f32.xlu0 %v1924
          %v1926 = vpop.xlane.xlu0 %1925
          %v1927 = vmul.f32 %v1926, %v461
          %v1928 = vadd.f32 %v1927, 1e-06
          %v1929 = vrsqrt.pop %v1928
          %v1930 = vmul.f32 %v1922, %v1929
          %v1931 = vlaneseq
          %v1932 = vshrl.u32 %v1931, 7
          %v1933 = vsub.s32 2, %v1932
          %v1934 = vrot.slane %v455, %v1933
          %v1935 = vmul.f32 %v1930, %v1934
          %v1936 = vpack.c.bf16 %v1935, %v1935
          %1937 = vrot.lane.b32.xlu0 %v1234, 64
          %v1938 = vpop.permute.xlu0 %1937
          %1939 = vrot.lane.b32.xlu0 %v1235, 64
          %v1940 = vpop.permute.xlu0 %1939
          %v1944 = vsel %vm457, %v1936, 0
          %1946 = vmatprep.subr.bf16.mxu0 0
          %1947 = vmatpush1.bf16.msra.mxu0 %v1938
          %1948 = vmatprep.subr.bf16.mxu0 0
          %1949 = vmatpush1.bf16.msra.mxu0 %v1940
          %1950 = vmatprep.subr.bf16.mxu0 0
          %1951 = vmatpush1.bf16.msra.mxu0 0
          %1952 = vmatprep.subr.bf16.mxu0 0
          %1953 = vmatpush1.bf16.msra.mxu0 0
          %1954 = vmatprep.subr.bf16.mxu0 0
          %1955 = vmatpush1.bf16.msra.mxu0 0
          %1956 = vmatprep.subr.bf16.mxu0 0
          %1957 = vmatpush1.bf16.msra.mxu0 0
          %1958 = vmatprep.subr.bf16.mxu0 0
          %1959 = vmatpush1.bf16.msra.mxu0 0
          %1960 = vmatprep.subr.bf16.mxu0 0
          %1961 = vmatpush1.bf16.msra.mxu0 0
          %1962 = vmatprep.subr.bf16.mxu0 0
          %1963 = vmatpush1.bf16.msra.mxu0 0
          %1964 = vmatprep.subr.bf16.mxu0 0
          %1965 = vmatpush1.bf16.msra.mxu0 0
          %1966 = vmatprep.subr.bf16.mxu0 0
          %1967 = vmatpush1.bf16.msra.mxu0 0
          %1968 = vmatprep.subr.bf16.mxu0 0
          %1969 = vmatpush1.bf16.msra.mxu0 0
          %1970 = vmatprep.subr.bf16.mxu0 0
          %1971 = vmatpush1.bf16.msra.mxu0 0
          %1972 = vmatprep.subr.bf16.mxu0 0
          %1973 = vmatpush1.bf16.msra.mxu0 0
          %1974 = vmatprep.subr.bf16.mxu0 0
          %1975 = vmatpush1.bf16.msra.mxu0 0
          %1976 = vmatprep.subr.bf16.mxu0 0
          %1977 = vmatpush1.bf16.msra.mxu0 0
          %1978 = vmatprep.mubr.bf16.mxu0 0
          %1979 = vmatmul.mubr.bf16.gmra.mrb[0].mxu0 %v1944
          %v1980 = vpop.f32.mrb[0].mxu0
          %v1981 = vadd.f32 0.0, %v1980
          %v1982 = vpop.f32.mrb[0].mxu0
          %v1983 = vpop.f32.mrb[0].mxu0
          %v1984 = vpop.f32.mrb[0].mxu0
          %1985 = vdwg.mxu0
          %v1986 = vmax.f32 %v1981, 0.0
          %v1987 = vpack.c.bf16 %v1986, %v1986
          %v1996 = vunpack.c.l.b16 %v446
          %v1997 = vunpack.c.l.b16 %v447
          %v1998 = vunpack.c.l.b16 %v448
          %v1999 = vunpack.c.l.b16 %v449
          %v2000 = vunpack.c.l.b16 %v450
          %v2001 = vunpack.c.l.b16 %v451
          %v2002 = vunpack.c.l.b16 %v452
          %v2003 = vunpack.c.l.b16 %v453
          %v2004 = vpack.c.b16 %v1997, %v1996
          %v2005 = vpack.c.b16 %v1999, %v1998
          %v2006 = vpack.c.b16 %v2001, %v2000
          %v2007 = vpack.c.b16 %v2003, %v2002
          %vm2012 = vcmask 523264
          %v2014 = vsel %vm2012, %v1987, 0
          %2016 = vmatprep.subr.bf16.mxu0 0
          %2017 = vmatpush1.bf16.msra.mxu0 %v2004
          %2018 = vmatprep.subr.bf16.mxu0 0
          %2019 = vmatpush1.bf16.msra.mxu0 %v2005
          %2020 = vmatprep.subr.bf16.mxu0 0
          %2021 = vmatpush1.bf16.msra.mxu0 %v2006
          %2022 = vmatprep.subr.bf16.mxu0 0
          %2023 = vmatpush1.bf16.msra.mxu0 %v2007
          %2024 = vmatprep.subr.bf16.mxu0 0
          %2025 = vmatpush1.bf16.msra.mxu0 0
          %2026 = vmatprep.subr.bf16.mxu0 0
          %2027 = vmatpush1.bf16.msra.mxu0 0
          %2028 = vmatprep.subr.bf16.mxu0 0
          %2029 = vmatpush1.bf16.msra.mxu0 0
          %2030 = vmatprep.subr.bf16.mxu0 0
          %2031 = vmatpush1.bf16.msra.mxu0 0
          %2032 = vmatprep.subr.bf16.mxu0 0
          %2033 = vmatpush1.bf16.msra.mxu0 0
          %2034 = vmatprep.subr.bf16.mxu0 0
          %2035 = vmatpush1.bf16.msra.mxu0 0
          %2036 = vmatprep.subr.bf16.mxu0 0
          %2037 = vmatpush1.bf16.msra.mxu0 0
          %2038 = vmatprep.subr.bf16.mxu0 0
          %2039 = vmatpush1.bf16.msra.mxu0 0
          %2040 = vmatprep.subr.bf16.mxu0 0
          %2041 = vmatpush1.bf16.msra.mxu0 0
          %2042 = vmatprep.subr.bf16.mxu0 0
          %2043 = vmatpush1.bf16.msra.mxu0 0
          %2044 = vmatprep.subr.bf16.mxu0 0
          %2045 = vmatpush1.bf16.msra.mxu0 0
          %2046 = vmatprep.subr.bf16.mxu0 0
          %2047 = vmatpush1.bf16.msra.mxu0 0
          %2048 = vmatprep.mubr.bf16.mxu0 0
          %2049 = vmatmul.mubr.bf16.gmra.mrb[0].mxu0 %v2014
          %v2050 = vpop.f32.mrb[0].mxu0
          %v2051 = vadd.f32 0.0, %v2050
          %v2052 = vpop.f32.mrb[0].mxu0
          %v2053 = vpop.f32.mrb[0].mxu0
          %v2054 = vpop.f32.mrb[0].mxu0
          %2055 = vdwg.mxu0
          %v2056 = vadd.f32 %v1922, %v2051
        $region61: #{encoder_vl_forward.1} parent=55 // loop_footer
          %s426 = sadd.s32 1, %s422
        $region62: #{encoder_vl_forward.1} parent=55 // loop_footer_branch
          %421 = sbr.rel target = $region58
        $region63: #{encoder_vl_forward.1} parent=55 // loop_exit
          _
        %s2057 = scalar_lea.vmem %s7, 16
        %v2058 = vld [vmem:[%s2057] sm:$0xff]
        %v2059 = vmul.f32 %v427, %v427
        %vm2060 = vcmask 261120
        %v2061 = vsel %vm2060, %v2059, 0.0
        %2062 = vadd.xlane.f32.xlu0 %v2061
        %v2063 = vpop.xlane.xlu0 %2062
        %v2064 = vrcp.pop 32.0
        %v2065 = vmul.f32 %v2063, %v2064
        %v2066 = vadd.f32 %v2065, 1e-06
        %v2067 = vrsqrt.pop %v2066
        %v2068 = vmul.f32 %v427, %v2067
        %v2069 = vlaneseq
        %v2070 = vshrl.u32 %v2069, 7
        %v2071 = vsub.s32 0, %v2070
        %v2072 = vrot.slane %v2058, %v2071
        %v2073 = vmul.f32 %v2068, %v2072
        %v2074 = vmul.f32 %v2073, 0.17677669
        %v2075 = vpack.c.bf16 %v2074, %v2074
        %v2076 = vld [vmem:[%s8] sm:$0xf]
        %v2077 = vld [vmem:[%s8 + $0x4] sm:$0xf]
        %v2078 = vld [vmem:[%s8 + $0x8] sm:$0xf]
        %v2079 = vld [vmem:[%s8 + $0xc] sm:$0xf]
        %v2084 = vunpack.c.l.b16 %v2076
        %v2085 = vunpack.c.l.b16 %v2077
        %v2086 = vunpack.c.l.b16 %v2078
        %v2087 = vunpack.c.l.b16 %v2079
        %v2088 = vpack.c.b16 %v2085, %v2084
        %v2089 = vpack.c.b16 %v2087, %v2086
        %v2093 = vsel %vm2060, %v2075, 0
        %2095 = vmatprep.subr.bf16.mxu0 0
        %2096 = vmatpush1.bf16.msra.mxu0 %v2088
        %2097 = vmatprep.subr.bf16.mxu0 0
        %2098 = vmatpush1.bf16.msra.mxu0 %v2089
        %2099 = vmatprep.subr.bf16.mxu0 0
        %2100 = vmatpush1.bf16.msra.mxu0 0
        %2101 = vmatprep.subr.bf16.mxu0 0
        %2102 = vmatpush1.bf16.msra.mxu0 0
        %2103 = vmatprep.subr.bf16.mxu0 0
        %2104 = vmatpush1.bf16.msra.mxu0 0
        %2105 = vmatprep.subr.bf16.mxu0 0
        %2106 = vmatpush1.bf16.msra.mxu0 0
        %2107 = vmatprep.subr.bf16.mxu0 0
        %2108 = vmatpush1.bf16.msra.mxu0 0
        %2109 = vmatprep.subr.bf16.mxu0 0
        %2110 = vmatpush1.bf16.msra.mxu0 0
        %2111 = vmatprep.subr.bf16.mxu0 0
        %2112 = vmatpush1.bf16.msra.mxu0 0
        %2113 = vmatprep.subr.bf16.mxu0 0
        %2114 = vmatpush1.bf16.msra.mxu0 0
        %2115 = vmatprep.subr.bf16.mxu0 0
        %2116 = vmatpush1.bf16.msra.mxu0 0
        %2117 = vmatprep.subr.bf16.mxu0 0
        %2118 = vmatpush1.bf16.msra.mxu0 0
        %2119 = vmatprep.subr.bf16.mxu0 0
        %2120 = vmatpush1.bf16.msra.mxu0 0
        %2121 = vmatprep.subr.bf16.mxu0 0
        %2122 = vmatpush1.bf16.msra.mxu0 0
        %2123 = vmatprep.subr.bf16.mxu0 0
        %2124 = vmatpush1.bf16.msra.mxu0 0
        %2125 = vmatprep.subr.bf16.mxu0 0
        %2126 = vmatpush1.bf16.msra.mxu0 0
        %2127 = vmatprep.mubr.bf16.mxu0 0
        %2128 = vmatmul.mubr.bf16.gmra.mrb[0].mxu0 %v2093
        %v2129 = vpop.f32.mrb[0].mxu0
        %v2130 = vadd.f32 0.0, %v2129
        %v2131 = vpop.f32.mrb[0].mxu0
        %v2132 = vpop.f32.mrb[0].mxu0
        %v2133 = vpop.f32.mrb[0].mxu0
        %2134 = vdwg.mxu0
        %2135 = vst [vmem:[%s388] sm:$0xff] %v2130
        %v2136 = vld [vmem:[%s408] sm:$0xff]
        %2137 = vmax.xlane.f32.xlu0 %v2130
        %v2138 = vpop.xlane.xlu0 %2137
        %v2139 = vsub.f32 %v2130, %v2138
        %v2140 = vmul.f32 %v2139, 1.442695
        %v2141 = vpow.pop %v2140
        %2142 = vadd.xlane.f32.xlu0 %v2141
        %v2143 = vpop.xlane.xlu0 %2142
        %v2144 = vlog2.pop %v2143
        %v2145 = vmul.f32 %v2144, 0.6931472
        %v2146 = vadd.f32 %v2145, %v2138
        %v2147 = vlaneseq
        %v2148 = vand.u32 %v2147, 127
        %2149 = vset.pattern.permute.xlu0 0
        %2150 = vperm.xlu0 %2149, %v2136
        %v2151 = vpop.permute.xlu0 %2150
        %vm2152 = vcmp.eq.s32.totalorder %v2148, %v2151
        %v2153 = vsel %vm2152, %v2130, 0.0
        %2154 = vadd.xlane.f32.xlu0 %v2153
        %v2155 = vpop.xlane.xlu0 %2154
        %vm2156 = vcmp.ne.s32.totalorder %v2136, 4294967196
        %v2157 = vsel %vm2156, 1, 0
        %v2158 = vcvt.s32.f32 %v2157
        %v2159 = vsub.f32 %v2146, %v2155
        %v2160 = vmul.f32 %v2159, %v2158
        %vm2161 = vcmask 7168
        %v2162 = vsel %vm2161, %v2160, 0.0
        %v2163 = vrot.slane %v2162, 4
        %v2164 = vadd.f32 %v2162, %v2163
        %v2165 = vrot.slane %v2164, 2
        %v2166 = vadd.f32 %v2164, %v2165
        %v2167 = vrot.slane %v2166, 1
        %v2168 = vadd.f32 %v2166, %v2167
        %v2169 = vsel %vm2161, %v2158, 0.0
        %v2170 = vrot.slane %v2169, 4
        %v2171 = vadd.f32 %v2169, %v2170
        %v2172 = vrot.slane %v2171, 2
        %v2173 = vadd.f32 %v2171, %v2172
        %v2174 = vrot.slane %v2173, 1
        %v2175 = vadd.f32 %v2173, %v2174
        %2177 = vrot.lane.b32.xlu0 %v2175, 1
        %v2178 = vpop.permute.xlu0 %2177
        %v2180 = vsel %vm2161, %v2168, %v2178
        %vm2181 = vcmask 8192
        %2182 = vst.msk [vmem:[%s411] sm:$0x1] %vm2181, %v2180
        %s2183 = sand.u32 %s242, 1
        %s2184 = scalar_lea.sflag [#allocation3], %s2183
        %s2185 = sand.u32 %s242, 1
        %s2186 = smul.addr %s2185, 8
        %s2187 = scalar_lea.vmem [#allocation2], %s2186
        %p2188 = scmp.lt.s32.totalorder %s25, 1
        %s2189 = scalar_select %p2188, %s25, 1
        %s2190 = scalar_lea.vmem %s10, %s2189
        // Predicated region
        $region64: #{encoder_vl_forward.1} parent=55 // pred_check
          %p2191 = pneg %p252
        $region65: #{encoder_vl_forward.1} parent=55 // pred_check_branch
          %2193 = sbr.rel (%p2191) target = $region67
        $region66: #{encoder_vl_forward.1} parent=55 // pred_region
          %s2195 = ssub.s32 128, 128
          %2196 = vsyncadd %s2184, %s2195
          %s2197 = smul.addr %s25, 128
          %s2198 = scalar_lea.hbm %s9, %s2197
          %s2200 = sshll.u32 %s2187, 4
          %s2201 = int_to_ptr.vmem [resolvable:$true] %s2200
          %2203 = dma.vmem_to_hbm [thread:$0]  %s2201, 128, %s2198, %s2184
        $region67: #{encoder_vl_forward.1} parent=55 // pred_fallthru
          _
        // Predicated region
        $region68: #{encoder_vl_forward.1} parent=55 // pred_check
          %p2204 = pneg %p278
        $region69: #{encoder_vl_forward.1} parent=55 // pred_check_branch
          %2206 = sbr.rel (%p2204) target = $region71
        $region70: #{encoder_vl_forward.1} parent=55 // pred_region
          _
        $region71: #{encoder_vl_forward.1} parent=55 // pred_fallthru
          _
      $region56: #{encoder_vl_forward.1} parent=5 // pred_fallthru
        _
      %p2207 = scmp.le.s32.totalorder 2, %s20
      // Predicated region
      $region72: #{encoder_vl_forward.1} parent=5 // pred_check
        %p2208 = pneg %p2207
      $region73: #{encoder_vl_forward.1} parent=5 // pred_check_branch
        %2210 = sbr.rel (%p2208) target = $region75
      $region74: #{encoder_vl_forward.1} parent=5 // pred_region
        %s2211 = ssub.s32 %s20, 2
        // Predicated region
        $region76: #{encoder_vl_forward.1} parent=74 // pred_check
          %p2212 = pneg %p258
        $region77: #{encoder_vl_forward.1} parent=74 // pred_check_branch
          %2214 = sbr.rel (%p2212) target = $region79
        $region78: #{encoder_vl_forward.1} parent=74 // pred_region
          %s2215 = sand.u32 %s243, 1
          %s2216 = scalar_lea.sflag [#allocation3], %s2215
          %s2217 = sand.u32 %s243, 1
          %s2218 = smul.addr %s2217, 8
          %s2219 = scalar_lea.vmem [#allocation2], %s2218
          %2220 = dma.done %s2216, 128
        $region79: #{encoder_vl_forward.1} parent=74 // pred_fallthru
          _
        // Predicated region
        $region80: #{encoder_vl_forward.1} parent=74 // pred_check
          %p2221 = pneg %p284
        $region81: #{encoder_vl_forward.1} parent=74 // pred_check_branch
          %2223 = sbr.rel (%p2221) target = $region83
        $region82: #{encoder_vl_forward.1} parent=74 // pred_region
          %p2224 = scmp.lt.s32.totalorder %s26, 1
          %s2225 = scalar_select %p2224, %s26, 1
          %s2226 = scalar_lea.vmem %s10, %s2225
        $region83: #{encoder_vl_forward.1} parent=74 // pred_fallthru
          _
      $region75: #{encoder_vl_forward.1} parent=5 // pred_fallthru
        _
    $region6: #{encoder_vl_forward.1} parent=1 // loop_footer
      %s24 = sadd.s32 1, %s20
    $region7: #{encoder_vl_forward.1} parent=1 // loop_footer_branch
      %19 = sbr.rel target = $region3
    $region8: #{encoder_vl_forward.1} parent=1 // loop_exit
      _
    %2227 = vsyncpa [#allocation3], 1
    %s2228 = scalar_lea.sflag [#allocation3], 1
    %2229 = vsyncpa %s2228, 1

</llo_original>
